<compile_context>
chip_gen: v7x
topology: tpu7x:2x2x1
jax: 0.10.0
libtpu: 0.0.40
codegen_flags: <defaults>
</compile_context>

<pallas_src>
import math

import jax
import jax.numpy as jnp
from jax.experimental import pallas as pl
from jax.experimental.pallas import tpu as pltpu

_F32 = jnp.float32
_F32_BYTES = 4


def _round_up(x, m):
    return ((x + m - 1) // m) * m


def _pick_tile(n, target, align):
    """Largest t <= min(target, n) with t % align == 0 and n % t == 0.

    `n` is always a multiple of 128 here, so a valid tile always exists and we
    never fall back to the full (possibly huge) dimension."""
    hi = min(target, n)
    t = (hi // align) * align
    while t >= align:
        if n % t == 0:
            return t
        t -= align
    return align


def _vmem_budget_bytes():
    """Generation-aware scoped-VMEM budget: ~75% of physical VMEM, capped at
    100 MiB.  -> ~48 MiB on v7x (64 MiB/TC), ~96-100 MiB on v5e/v6e (128 MiB)."""
    cap = 64 << 20
    try:
        cap = int(pltpu.get_tpu_info().vmem_capacity_bytes)
    except Exception:
        pass
    return int(min(cap * 3 // 4, 100 << 20))


# ------------------------- support = X @ W (F_in > F_out path) --------------

def _support_kernel(x_ref, w_ref, o_ref):
    o_ref[...] = jnp.dot(x_ref[...], w_ref[...], preferred_element_type=jnp.float32)


def _compute_support(x, weight, tile_rows, vmem_limit):
    n, f_in = x.shape
    f_out = weight.shape[1]
    tm = _pick_tile(n, tile_rows, 8)
    return pl.pallas_call(
        _support_kernel,
        out_shape=jax.ShapeDtypeStruct((n, f_out), _F32),
        grid_spec=pltpu.PrefetchScalarGridSpec(
            num_scalar_prefetch=0,
            grid=(n // tm,),
            in_specs=[
                pl.BlockSpec((tm, f_in), lambda i: (i, 0)),
                pl.BlockSpec((f_in, f_out), lambda i: (0, 0)),  # tiny, resident
            ],
            out_specs=pl.BlockSpec((tm, f_out), lambda i: (i, 0)),
        ),
        compiler_params=pltpu.CompilerParams(
            dimension_semantics=("parallel",),
            vmem_limit_bytes=vmem_limit,
        ),
    )(x, weight)


# --------------------------------- main kernels ------------------------------

def _make_fused_kernel(tk, rhs_resident, mm_dtype, apply_relu):
    """out = act((adj @ X) @ W); acc holds the (tm, F_in) partial of adj @ X."""

    def kernel(adj_ref, x_ref, w_ref, o_ref, acc_ref):
        k = pl.program_id(1)

        @pl.when(k == 0)
        def _():
            acc_ref[...] = jnp.zeros_like(acc_ref)

        adj_tile = adj_ref[...]
        if rhs_resident:
            start = pl.multiple_of(k * tk, tk)
            x_tile = x_ref[pl.ds(start, tk), :]
        else:
            x_tile = x_ref[...]
        if mm_dtype != _F32:
            adj_tile = adj_tile.astype(mm_dtype)   # in-kernel cast: no extra HBM pass
            x_tile = x_tile.astype(mm_dtype)
        acc_ref[...] += jnp.dot(adj_tile, x_tile, preferred_element_type=jnp.float32)

        @pl.when(k == pl.num_programs(1) - 1)
        def _():
            h = jnp.dot(acc_ref[...], w_ref[...], preferred_element_type=jnp.float32)
            if apply_relu:
                h = jnp.maximum(h, 0.0)
            o_ref[...] = h.astype(o_ref.dtype)

    return kernel


def _make_post_kernel(tk, rhs_resident, mm_dtype, apply_relu):
    """out = act(adj @ support); accumulates directly into the resident f32 o_ref."""

    def kernel(adj_ref, s_ref, o_ref):
        k = pl.program_id(1)

        @pl.when(k == 0)
        def _():
            o_ref[...] = jnp.zeros_like(o_ref)

        adj_tile = adj_ref[...]
        if rhs_resident:
            start = pl.multiple_of(k * tk, tk)
            s_tile = s_ref[pl.ds(start, tk), :]
        else:
            s_tile = s_ref[...]
        if mm_dtype != _F32:
            adj_tile = adj_tile.astype(mm_dtype)
            s_tile = s_tile.astype(mm_dtype)
        o_ref[...] += jnp.dot(adj_tile, s_tile, preferred_element_type=jnp.float32)

        if apply_relu:
            @pl.when(k == pl.num_programs(1) - 1)
            def _():
                o_ref[...] = jnp.maximum(o_ref[...], 0.0)

    return kernel


# ----------------------------------- wrapper ---------------------------------

def graph_convolution(x, adj, weight, *, act="relu", tile_rows=512, tile_k=1024,
                      use_bf16=False):
    """Pallas forward of GraphConvolution (dropout=0 / eval; act in {"relu", None})."""
    n, f_in = x.shape
    f_out = weight.shape[1]
    assert adj.shape == (n, n)
    assert act in ("relu", None)

    if x.dtype != _F32:
        x = x.astype(_F32)
    if weight.dtype != _F32:
        weight = weight.astype(_F32)
    if adj.dtype != _F32:
        adj = adj.astype(_F32)  # only pays an extra pass if adj wasn't already f32

    # Pad N up to a multiple of 128 so a valid (8,128)-aligned tiling always exists.
    n_pad = max(_round_up(n, 128), 128)
    if n_pad != n:
        adj = jnp.pad(adj, ((0, n_pad - n), (0, n_pad - n)))
        x = jnp.pad(x, ((0, n_pad - n), (0, 0)))

    vmem_budget = _vmem_budget_bytes()
    mm_dtype = jnp.bfloat16 if use_bf16 else _F32
    apply_relu = act == "relu"

    # Reorder to (adj @ X) @ W when that shrinks the big matmul's contraction dim.
    fuse_w = f_in <= f_out
    if fuse_w:
        rhs, rhs_cols = x, f_in
    else:
        rhs = _compute_support(x, weight, tile_rows, vmem_budget)
        rhs_cols = f_out

    # Tiles: as large as divisibility allows, keep >=2 row tiles for v7x megacore.
    tm_target = tile_rows
    if n_pad // 2 >= 8:
        tm_target = min(tm_target, (n_pad // 2 // 8) * 8)
    tm = _pick_tile(n_pad, tm_target, 8)
    tk = _pick_tile(n_pad, tile_k, 128)
    grid = (n_pad // tm, n_pad // tk)

    # VMEM footprint (double-buffered pipeline blocks) and RHS residency gate.
    base = 2 * tm * tk * _F32_BYTES          # adj tiles
    base += 2 * tm * f_out * _F32_BYTES      # output tiles
    if fuse_w:
        base += 2 * f_in * f_out * _F32_BYTES   # W (tiny, grid-invariant)
        base += tm * rhs_cols * _F32_BYTES      # f32 accumulator scratch
    rhs_full = 2 * n_pad * rhs_cols * _F32_BYTES
    rhs_resident = base + rhs_full <= vmem_budget
    if rhs_resident:
        rhs_spec = pl.BlockSpec((n_pad, rhs_cols), lambda i, k: (0, 0))
    else:
        rhs_spec = pl.BlockSpec((tk, rhs_cols), lambda i, k: (k, 0))

    flops = 2 * n_pad * n_pad * rhs_cols
    if fuse_w:
        flops += 2 * n_pad * f_in * f_out
    rhs_bytes = n_pad * rhs_cols * _F32_BYTES * (1 if rhs_resident else grid[0])
    cost = pl.CostEstimate(
        flops=flops,
        transcendentals=0,
        bytes_accessed=n_pad * n_pad * _F32_BYTES + rhs_bytes
        + n_pad * f_out * _F32_BYTES + f_in * f_out * _F32_BYTES,
    )

    in_specs = [pl.BlockSpec((tm, tk), lambda i, k: (i, k)), rhs_spec]
    operands = [adj, rhs]
    scratch_shapes = []
    if fuse_w:
        in_specs.append(pl.BlockSpec((f_in, f_out), lambda i, k: (0, 0)))
        operands.append(weight)
        scratch_shapes.append(pltpu.VMEM((tm, rhs_cols), jnp.float32))
        kernel = _make_fused_kernel(tk, rhs_resident, mm_dtype, apply_relu)
    else:
        kernel = _make_post_kernel(tk, rhs_resident, mm_dtype, apply_relu)

    out = pl.pallas_call(
        kernel,
        out_shape=jax.ShapeDtypeStruct((n_pad, f_out), _F32),
        grid_spec=pltpu.PrefetchScalarGridSpec(
            num_scalar_prefetch=0,
            grid=grid,
            in_specs=in_specs,
            out_specs=pl.BlockSpec((tm, f_out), lambda i, k: (i, 0)),
            scratch_shapes=scratch_shapes,
        ),
        compiler_params=pltpu.CompilerParams(
            dimension_semantics=("parallel", "arbitrary"),
            vmem_limit_bytes=vmem_budget,
        ),
        cost_estimate=cost,
    )(*operands)

    return out[:n] if n_pad != n else out


# ------------------------------------ test -----------------------------------

def xavier_uniform(key, shape, dtype=jnp.float32):
    fan_in, fan_out = shape
    limit = math.sqrt(6.0 / (fan_in + fan_out))
    return jax.random.uniform(key, shape, dtype=dtype, minval=-limit, maxval=limit)


def _make_graph(key, n):
    a = (jax.random.uniform(key, (n, n)) < 0.05).astype(jnp.float32)
    a = jnp.maximum(a, a.T) + jnp.eye(n, dtype=jnp.float32)
    d_inv_sqrt = 1.0 / jnp.sqrt(jnp.sum(a, axis=1))
    return a * d_inv_sqrt[:, None] * d_inv_sqrt[None, :]


def _reference(x, adj, w):
    support = jnp.dot(x, w, preferred_element_type=jnp.float32)
    return jnp.maximum(jnp.dot(adj, support, preferred_element_type=jnp.float32), 0.0)


if __name__ == "__main__":
    key = jax.random.PRNGKey(0)
    k1, k2, k3, k4, k5, k6 = jax.random.split(key, 6)

    # Case 1: F_in < F_out -> fused (adj @ X) @ W path, divisible N.
    n, f_in, f_out = 512, 64, 128
    x = jax.random.normal(k1, (n, f_in), dtype=jnp.float32)
    adj = _make_graph(k2, n)
    w = xavier_uniform(k3, (f_in, f_out))

    out = jax.block_until_ready(graph_convolution(x, adj, w))
    ref = _reference(x, adj, w)
    assert out.shape == (n, f_out)
    assert jnp.allclose(out, ref, atol=1e-3, rtol=1e-3)

    # Optional in-kernel bf16 MXU path (no wrapper-side cast, no extra HBM pass).
    out_bf = jax.block_until_ready(graph_convolution(x, adj, w, use_bf16=True))
    assert jnp.allclose(out_bf, ref, atol=3e-2, rtol=3e-2)

    # Case 2: F_in > F_out and N not a multiple of 128 -> support-precompute path + padding.
    n2, f_in2, f_out2 = 300, 96, 32
    x2 = jax.random.normal(k4, (n2, f_in2), dtype=jnp.float32)
    adj2 = _make_graph(k5, n2)
    w2 = xavier_uniform(k6, (f_in2, f_out2))

    out2 = jax.block_until_ready(graph_convolution(x2, adj2, w2))
    ref2 = _reference(x2, adj2, w2)
    assert out2.shape == (n2, f_out2)
    assert jnp.allclose(out2, ref2, atol=1e-3, rtol=1e-3)

    print("KERNEL_OK")
</pallas_src>

<mosaic_0001>
module attributes {stable_mosaic.version = 11 : i64} {
  func.func @kernel(%arg0: i32, %arg1: i32, %arg2: memref<256x512xf32, #tpu.memory_space<vmem>>, %arg3: memref<512x64xf32, #tpu.memory_space<vmem>>, %arg4: memref<64x128xf32, #tpu.memory_space<vmem>>, %arg5: memref<256x128xf32, #tpu.memory_space<vmem>>, %arg6: memref<256x64xf32, #tpu.memory_space<vmem>>) attributes {dimension_semantics = [#tpu.dimension_semantics<parallel>, #tpu.dimension_semantics<arbitrary>], iteration_bounds = array<i64: 2, 1>, scalar_prefetch = 0 : i64, scratch_operands = 1 : i64, tpu.core_type = #tpu.core_type<tc>, window_params = [{transform_indices = @transform_0, window_bounds = array<i64: 256, 512>}, {pipeline_mode = #tpu.pipeline_mode<synchronous>, transform_indices = @transform_1, window_bounds = array<i64: 512, 64>}, {pipeline_mode = #tpu.pipeline_mode<synchronous>, transform_indices = @transform_2, window_bounds = array<i64: 64, 128>}, {transform_indices = @transform_3, window_bounds = array<i64: 256, 128>}]} {
    %c0_i32 = arith.constant 0 : i32
    %0 = arith.cmpi eq, %arg1, %c0_i32 : i32
    %1 = arith.extui %0 : i1 to i32
    %c0_i32_0 = arith.constant 0 : i32
    %2 = arith.cmpi ne, %1, %c0_i32_0 : i32
    scf.if %2 {
      %cst_9 = arith.constant 0.000000e+00 : f32
      %15 = vector.broadcast %cst_9 : f32 to vector<256x64xf32>
      %c0_10 = arith.constant 0 : index
      %c0_11 = arith.constant 0 : index
      %16 = vector.load %arg6[%c0_10, %c0_11] : memref<256x64xf32, #tpu.memory_space<vmem>>, vector<256x64xf32>
      tpu.vector_store %arg6[%c0_10, %c0_11], %15 {strides = array<i32>} : memref<256x64xf32, #tpu.memory_space<vmem>>, vector<256x64xf32>,
    } else {
    }
    %c0 = arith.constant 0 : index
    %c0_1 = arith.constant 0 : index
    %3 = vector.load %arg2[%c0, %c0_1] : memref<256x512xf32, #tpu.memory_space<vmem>>, vector<256x512xf32>
    %c512_i32 = arith.constant 512 : i32
    %4 = arith.muli %arg1, %c512_i32 : i32
    %5 = tpu.assume_multiple %4, 512 : i32
    %6 = arith.index_cast %5 : i32 to index
    %c0_2 = arith.constant 0 : index
    %7 = vector.load %arg3[%6, %c0_2] : memref<512x64xf32, #tpu.memory_space<vmem>>, vector<512x64xf32>
    %c0_3 = arith.constant 0 : index
    %c0_4 = arith.constant 0 : index
    %8 = vector.load %arg6[%c0_3, %c0_4] : memref<256x64xf32, #tpu.memory_space<vmem>>, vector<256x64xf32>
    %cst = arith.constant dense<0.000000e+00> : vector<256x64xf32>
    %9 = tpu.matmul %3, %7, %cst {dimension_numbers = #tpu.dot_dimension_numbers<[1], [0], [0], [1], [0, 0, 1, 1], [], []>} : vector<256x512xf32>, vector<512x64xf32>, vector<256x64xf32> -> vector<256x64xf32>
    %10 = arith.addf %8, %9 : vector<256x64xf32>
    %c0_5 = arith.constant 0 : index
    %c0_6 = arith.constant 0 : index
    %11 = vector.load %arg6[%c0_5, %c0_6] : memref<256x64xf32, #tpu.memory_space<vmem>>, vector<256x64xf32>
    tpu.vector_store %arg6[%c0_5, %c0_6], %10 {strides = array<i32>} : memref<256x64xf32, #tpu.memory_space<vmem>>, vector<256x64xf32>,
    %c0_i32_7 = arith.constant 0 : i32
    %12 = arith.cmpi eq, %arg1, %c0_i32_7 : i32
    %13 = arith.extui %12 : i1 to i32
    %c0_i32_8 = arith.constant 0 : i32
    %14 = arith.cmpi ne, %13, %c0_i32_8 : i32
    scf.if %14 {
      %c0_9 = arith.constant 0 : index
      %c0_10 = arith.constant 0 : index
      %15 = vector.load %arg6[%c0_9, %c0_10] : memref<256x64xf32, #tpu.memory_space<vmem>>, vector<256x64xf32>
      %c0_11 = arith.constant 0 : index
      %c0_12 = arith.constant 0 : index
      %16 = vector.load %arg4[%c0_11, %c0_12] : memref<64x128xf32, #tpu.memory_space<vmem>>, vector<64x128xf32>
      %cst_13 = arith.constant dense<0.000000e+00> : vector<256x128xf32>
      %17 = tpu.matmul %15, %16, %cst_13 {dimension_numbers = #tpu.dot_dimension_numbers<[1], [0], [0], [1], [0, 0, 1, 1], [], []>} : vector<256x64xf32>, vector<64x128xf32>, vector<256x128xf32> -> vector<256x128xf32>
      %cst_14 = arith.constant 0.000000e+00 : f32
      %18 = vector.broadcast %cst_14 : f32 to vector<256x128xf32>
      %19 = arith.maximumf %17, %18 : vector<256x128xf32>
      %c0_15 = arith.constant 0 : index
      %c0_16 = arith.constant 0 : index
      %20 = vector.load %arg5[%c0_15, %c0_16] : memref<256x128xf32, #tpu.memory_space<vmem>>, vector<256x128xf32>
      tpu.vector_store %arg5[%c0_15, %c0_16], %19 {strides = array<i32>} : memref<256x128xf32, #tpu.memory_space<vmem>>, vector<256x128xf32>,
    } else {
    }
    return
  }
  func.func @transform_0(%arg0: i32, %arg1: i32) -> (i32, i32) {
    %c0_i32 = arith.constant 0 : i32
    return %arg0, %arg1 : i32, i32
  }
  func.func @transform_1(%arg0: i32, %arg1: i32) -> (i32, i32) {
    %c0_i32 = arith.constant 0 : i32
    %c0_i32_0 = arith.constant 0 : i32
    %c0_i32_1 = arith.constant 0 : i32
    return %c0_i32, %c0_i32_0 : i32, i32
  }
  func.func @transform_2(%arg0: i32, %arg1: i32) -> (i32, i32) {
    %c0_i32 = arith.constant 0 : i32
    %c0_i32_0 = arith.constant 0 : i32
    %c0_i32_1 = arith.constant 0 : i32
    return %c0_i32, %c0_i32_0 : i32, i32
  }
  func.func @transform_3(%arg0: i32, %arg1: i32) -> (i32, i32) {
    %c0_i32 = arith.constant 0 : i32
    %c0_i32_0 = arith.constant 0 : i32
    return %arg0, %c0_i32 : i32, i32
  }
}

</mosaic_0001>

<llo_original>
// kernel: tpu_custom_call.1
$region0: #{tpu_custom_call.1}
  #allocation0 [shape = 'u32[]', space=smem, size = 0x4, offset = 0x4, fixed_abs, tag = 'smem constant byte address 0x4 - core index']
  #allocation1 [shape = 'u32[144,128]{1,0:T(1,128)}', space=vmem, size = 0x12000, scoped, tag = 'internal scratch']
  #allocation2 [shape = 'f32[256,64]{1,0:T(8,128)}', space=vmem, size = 0x20000, scoped, tag = 'scratch operand']
  %s0 = inlined_call_operand.hbm [shape: f32[512,512], index: 0, kind: input, shape index: {}]
  %s1 = inlined_call_operand.vmem [shape: f32[512,64], index: 1, kind: input, shape index: {}]
  %s2 = inlined_call_operand.vmem [shape: f32[64,128], index: 2, kind: input, shape index: {}]
  %s3 = inlined_call_operand.hbm [shape: f32[512,128], index: 3, kind: output, shape index: {}]
  %s4 = sld [smem:[#allocation0]]
  $region57: #{tpu_custom_call.1} parent=0
    _
  %s6 = ssub.s32 1, %s4
  %s7 = scalar_select 0, %s6, %s4
  $region1: #{tpu_custom_call.1} parent=0
    #allocation3 [shape = 'u8[1048576]{0}', space=vmem, size = 0x100000, scoped, tag = 'input window, operand 0']
    #allocation4 [shape = 's32[2]{0}', space=sflag, size = 0x8, scoped, tag = 'scoped memory for tpu_custom_call.1']
    #allocation5 [shape = 's32[2]{0}', space=sflag, size = 0x8, scoped, tag = 'scoped memory for tpu_custom_call.1']
    #allocation6 [shape = 'u8[262144]{0}', space=vmem, size = 0x40000, scoped, tag = 'output window, operand 0']
    %8 = vsyncpa [#allocation4], 0
    %s9 = scalar_lea.sflag [#allocation4], 1
    %10 = vsyncpa %s9, 0
    %11 = vsyncpa [#allocation5], 0
    %s12 = scalar_lea.sflag [#allocation5], 1
    %13 = vsyncpa %s12, 0
    loop: start=0, step=1, limit=4
    $region2: #{tpu_custom_call.1} parent=1 // loop_pre_header
      _
    $region3: #{tpu_custom_call.1} parent=1 // loop_header
      %s15 = sphi 0, %s19
      %p16 = scmp.ge.s32.totalorder %s15, 4
      %s22 = sphi 0, %s34
      %s23 = sphi 0, %s30
      %s24 = sphi 0, %s22
      %s25 = sphi 0, %s23
      %s26 = sphi 0, %s24
      %s27 = sphi 0, %s25
      %s39 = sphi 0, %s41
      %s42 = sphi 0, %s39
      %s43 = sphi 0, %s42
      %s59 = sphi 0, %s43
      %s63 = sphi 0, %s63
      %s65 = sphi 0, %s63
      %s66 = sphi 0, %s65
      %s80 = sphi 0, %s66
      %s84 = sphi 0, %s84
      %s86 = sphi 0, %s84
      %s87 = sphi 0, %s86
      %s101 = sphi 0, %s87
      %s107 = sphi 0, %s109
      %s110 = sphi 0, %s107
      %s111 = sphi 0, %s110
      %s127 = sphi 0, %s111
    $region4: #{tpu_custom_call.1} parent=1 // loop_header_branch
      %18 = sbr.rel (%p16) target = $region8
    $region5: #{tpu_custom_call.1} parent=1 // loop_body
      %s20 = ssub.s32 %s15, 1
      %s21 = ssub.s32 %s15, 2
      %s28 = sadd.s32 1, %s23
      %p29 = scmp.ge.s32.totalorder %s28, 1
      %s30 = scalar_select %p29, 0, %s28
      %s31 = sadd.s32 1, %s22
      %s32 = scalar_select %p29, %s31, %s22
      %p33 = scmp.ge.s32.totalorder %s32, 2
      %s34 = scalar_select %p33, 0, %s32
      %s35 = ssub.s32 %s22, %s34
      %s36 = ssub.s32 %s23, %s30
      %s37 = sor.u32 %s35, %s36
      %p38 = scmp.eq.s32.totalorder %s37, 0
      %s40 = sadd.s32 %s39, 1
      %s41 = scalar_select %p38, %s39, %s40
      %p44 = pneg %p38
      %p45 = scmp.eq.s32.totalorder %s15, 1
      %p46 = por %p44, %p45
      %p47 = scmp.ne.s32.totalorder %s39, %s42
      %p48 = scmp.eq.s32.totalorder %s15, 0
      %p49 = por %p47, %p48
      %p50 = scmp.ne.s32.totalorder %s39, %s42
      %p51 = scmp.eq.s32.totalorder %s20, 1
      %p52 = por %p50, %p51
      %p53 = scmp.ne.s32.totalorder %s42, %s43
      %p54 = scmp.eq.s32.totalorder %s20, 0
      %p55 = por %p53, %p54
      %p56 = scmp.ne.s32.totalorder %s42, %s43
      %p57 = scmp.eq.s32.totalorder %s21, 1
      %p58 = por %p56, %p57
      %p60 = scmp.ne.s32.totalorder %s43, %s59
      %p61 = scmp.eq.s32.totalorder %s21, 0
      %p62 = por %p60, %p61
      %s64 = sadd.s32 %s63, 1
      %p67 = scmp.eq.s32.totalorder %s15, 1
      %p68 = scmp.ne.s32.totalorder %s63, %s65
      %p69 = scmp.eq.s32.totalorder %s15, 0
      %p70 = por %p68, %p69
      %p71 = scmp.ne.s32.totalorder %s63, %s65
      %p72 = scmp.eq.s32.totalorder %s20, 1
      %p73 = por %p71, %p72
      %p74 = scmp.ne.s32.totalorder %s65, %s66
      %p75 = scmp.eq.s32.totalorder %s20, 0
      %p76 = por %p74, %p75
      %p77 = scmp.ne.s32.totalorder %s65, %s66
      %p78 = scmp.eq.s32.totalorder %s21, 1
      %p79 = por %p77, %p78
      %p81 = scmp.ne.s32.totalorder %s66, %s80
      %p82 = scmp.eq.s32.totalorder %s21, 0
      %p83 = por %p81, %p82
      %s85 = sadd.s32 %s84, 1
      %p88 = scmp.eq.s32.totalorder %s15, 1
      %p89 = scmp.ne.s32.totalorder %s84, %s86
      %p90 = scmp.eq.s32.totalorder %s15, 0
      %p91 = por %p89, %p90
      %p92 = scmp.ne.s32.totalorder %s84, %s86
      %p93 = scmp.eq.s32.totalorder %s20, 1
      %p94 = por %p92, %p93
      %p95 = scmp.ne.s32.totalorder %s86, %s87
      %p96 = scmp.eq.s32.totalorder %s20, 0
      %p97 = por %p95, %p96
      %p98 = scmp.ne.s32.totalorder %s86, %s87
      %p99 = scmp.eq.s32.totalorder %s21, 1
      %p100 = por %p98, %p99
      %p102 = scmp.ne.s32.totalorder %s87, %s101
      %p103 = scmp.eq.s32.totalorder %s21, 0
      %p104 = por %p102, %p103
      %s105 = ssub.s32 %s22, %s34
      %p106 = scmp.eq.s32.totalorder %s105, 0
      %s108 = sadd.s32 %s107, 1
      %s109 = scalar_select %p106, %s107, %s108
      %p112 = pneg %p106
      %p113 = scmp.eq.s32.totalorder %s15, 1
      %p114 = por %p112, %p113
      %p115 = scmp.ne.s32.totalorder %s107, %s110
      %p116 = scmp.eq.s32.totalorder %s15, 0
      %p117 = por %p115, %p116
      %p118 = scmp.ne.s32.totalorder %s107, %s110
      %p119 = scmp.eq.s32.totalorder %s20, 1
      %p120 = por %p118, %p119
      %p121 = scmp.ne.s32.totalorder %s110, %s111
      %p122 = scmp.eq.s32.totalorder %s20, 0
      %p123 = por %p121, %p122
      %p124 = scmp.ne.s32.totalorder %s110, %s111
      %p125 = scmp.eq.s32.totalorder %s21, 1
      %p126 = por %p124, %p125
      %p128 = scmp.ne.s32.totalorder %s111, %s127
      %p129 = scmp.eq.s32.totalorder %s21, 0
      %p130 = por %p128, %p129
      %p131 = scmp.le.s32.totalorder 1, %s15
      %p132 = scmp.lt.s32.totalorder %s15, 3
      %p133 = pnand %p131, %p132
      %p134 = pneg %p133
      // Predicated region
      $region9: #{tpu_custom_call.1} parent=5 // pred_check
        _
      $region10: #{tpu_custom_call.1} parent=5 // pred_check_branch
        %136 = sbr.rel (%p133) target = $region12
      $region11: #{tpu_custom_call.1} parent=5 // pred_region
        %s137 = ssub.s32 %s15, 1
        // Predicated region
        $region13: #{tpu_custom_call.1} parent=11 // pred_check
          %p138 = pneg %p76
        $region14: #{tpu_custom_call.1} parent=11 // pred_check_branch
          %140 = sbr.rel (%p138) target = $region16
        $region15: #{tpu_custom_call.1} parent=11 // pred_region
          _
        $region16: #{tpu_custom_call.1} parent=11 // pred_fallthru
          _
        // Predicated region
        $region17: #{tpu_custom_call.1} parent=11 // pred_check
          %p141 = pneg %p97
        $region18: #{tpu_custom_call.1} parent=11 // pred_check_branch
          %143 = sbr.rel (%p141) target = $region20
        $region19: #{tpu_custom_call.1} parent=11 // pred_region
          _
        $region20: #{tpu_custom_call.1} parent=11 // pred_fallthru
          _
      $region12: #{tpu_custom_call.1} parent=5 // pred_fallthru
        _
      %p144 = scmp.lt.s32.totalorder %s15, 2
      // Predicated region
      $region21: #{tpu_custom_call.1} parent=5 // pred_check
        %p145 = pneg %p144
      $region22: #{tpu_custom_call.1} parent=5 // pred_check_branch
        %147 = sbr.rel (%p145) target = $region24
      $region23: #{tpu_custom_call.1} parent=5 // pred_region
        // Predicated region
        $region25: #{tpu_custom_call.1} parent=23 // pred_check
          %p148 = pneg %p49
        $region26: #{tpu_custom_call.1} parent=23 // pred_check_branch
          %150 = sbr.rel (%p148) target = $region28
        $region27: #{tpu_custom_call.1} parent=23 // pred_region
          %s151 = sand.u32 %s39, 1
          %s152 = scalar_lea.sflag [#allocation4], %s151
          %s153 = sand.u32 %s39, 1
          %s154 = smul.addr %s153, 1024
          %s155 = scalar_lea.vmem [#allocation3], %s154
          %s156 = smul.u32 32, %s22
          %s157 = smul.u32 4, %s23
          %s159 = ssub.s32 16384, 16384
          %160 = vsyncadd %s152, %s159
          %s161 = smul.addr %s156, 4
          %s162 = sadd.s32 %s157, %s161
          %s163 = smul.addr %s162, 128
          %s164 = scalar_lea.hbm %s0, %s163
          %s165 = sshll.u32 %s155, 4
          %s166 = int_to_ptr.vmem [resolvable:$true] %s165
          %171 = dma.hbm_to_vmem [thread:$0]  %s164, 16384, %s166, %s152, 512, 512, 32
        $region28: #{tpu_custom_call.1} parent=23 // pred_fallthru
          _
      $region24: #{tpu_custom_call.1} parent=5 // pred_fallthru
        _
      %p172 = scmp.le.s32.totalorder 1, %s15
      %p173 = scmp.lt.s32.totalorder %s15, 3
      %p174 = pnand %p172, %p173
      %p175 = pneg %p174
      // Predicated region
      $region29: #{tpu_custom_call.1} parent=5 // pred_check
        _
      $region30: #{tpu_custom_call.1} parent=5 // pred_check_branch
        %177 = sbr.rel (%p174) target = $region32
      $region31: #{tpu_custom_call.1} parent=5 // pred_region
        %s178 = ssub.s32 %s15, 1
        %s179 = sand.u32 %s42, 1
        %s180 = scalar_lea.sflag [#allocation4], %s179
        %s181 = sand.u32 %s42, 1
        %s182 = smul.addr %s181, 1024
        %s183 = scalar_lea.vmem [#allocation3], %s182
        // Predicated region
        $region33: #{tpu_custom_call.1} parent=31 // pred_check
          %p184 = pneg %p55
        $region34: #{tpu_custom_call.1} parent=31 // pred_check_branch
          %186 = sbr.rel (%p184) target = $region36
        $region35: #{tpu_custom_call.1} parent=31 // pred_region
          %187 = dma.done %s180, 16384
        $region36: #{tpu_custom_call.1} parent=31 // pred_fallthru
          _
        %s188 = sand.u32 %s42, 1
        %s189 = scalar_lea.sflag [#allocation4], %s188
        %s190 = sand.u32 %s42, 1
        %s191 = smul.addr %s190, 1024
        %s192 = scalar_lea.vmem [#allocation3], %s191
        %p193 = pneg %p55
        %p194 = pneg %p52
        %p195 = pneg %p76
        %p196 = pneg %p73
        %p197 = pneg %p97
        %p198 = pneg %p94
        %p199 = pneg %p123
        %p200 = pneg %p120
        %s201 = sand.u32 %s110, 1
        %s202 = scalar_lea.sflag [#allocation5], %s201
        %s203 = sand.u32 %s110, 1
        %s204 = smul.addr %s203, 256
        %s205 = scalar_lea.vmem [#allocation6], %s204
        %s206 = smul.u32 32, %s24
        %s207 = smul.u32 4, %s25
        %s208 = smul.u32 32, %s24
        %p209 = scmp.eq.s32.totalorder %s25, 0
        // Predicated region
        $region37: #{tpu_custom_call.1} parent=31 // pred_check
          %p210 = pneg %p209
        $region38: #{tpu_custom_call.1} parent=31 // pred_check_branch
          %212 = sbr.rel (%p210) target = $region40
        $region39: #{tpu_custom_call.1} parent=31 // pred_region
          %vm213 = vcmask 523264
          %214 = vst.msk [vmem:[#allocation2] sm:$0xff] %vm213, 0.0
          %215 = vst.msk [vmem:[#allocation2 + $0x8] sm:$0xff] %vm213, 0.0
          %216 = vst.msk [vmem:[#allocation2 + $0x10] sm:$0xff] %vm213, 0.0
          %217 = vst.msk [vmem:[#allocation2 + $0x18] sm:$0xff] %vm213, 0.0
          %218 = vst.msk [vmem:[#allocation2 + $0x20] sm:$0xff] %vm213, 0.0
          %219 = vst.msk [vmem:[#allocation2 + $0x28] sm:$0xff] %vm213, 0.0
          %220 = vst.msk [vmem:[#allocation2 + $0x30] sm:$0xff] %vm213, 0.0
          %221 = vst.msk [vmem:[#allocation2 + $0x38] sm:$0xff] %vm213, 0.0
          %222 = vst.msk [vmem:[#allocation2 + $0x40] sm:$0xff] %vm213, 0.0
          %223 = vst.msk [vmem:[#allocation2 + $0x48] sm:$0xff] %vm213, 0.0
          %224 = vst.msk [vmem:[#allocation2 + $0x50] sm:$0xff] %vm213, 0.0
          %225 = vst.msk [vmem:[#allocation2 + $0x58] sm:$0xff] %vm213, 0.0
          %226 = vst.msk [vmem:[#allocation2 + $0x60] sm:$0xff] %vm213, 0.0
          %227 = vst.msk [vmem:[#allocation2 + $0x68] sm:$0xff] %vm213, 0.0
          %228 = vst.msk [vmem:[#allocation2 + $0x70] sm:$0xff] %vm213, 0.0
          %229 = vst.msk [vmem:[#allocation2 + $0x78] sm:$0xff] %vm213, 0.0
          %230 = vst.msk [vmem:[#allocation2 + $0x80] sm:$0xff] %vm213, 0.0
          %231 = vst.msk [vmem:[#allocation2 + $0x88] sm:$0xff] %vm213, 0.0
          %232 = vst.msk [vmem:[#allocation2 + $0x90] sm:$0xff] %vm213, 0.0
          %233 = vst.msk [vmem:[#allocation2 + $0x98] sm:$0xff] %vm213, 0.0
          %234 = vst.msk [vmem:[#allocation2 + $0xa0] sm:$0xff] %vm213, 0.0
          %235 = vst.msk [vmem:[#allocation2 + $0xa8] sm:$0xff] %vm213, 0.0
          %236 = vst.msk [vmem:[#allocation2 + $0xb0] sm:$0xff] %vm213, 0.0
          %237 = vst.msk [vmem:[#allocation2 + $0xb8] sm:$0xff] %vm213, 0.0
          %238 = vst.msk [vmem:[#allocation2 + $0xc0] sm:$0xff] %vm213, 0.0
          %239 = vst.msk [vmem:[#allocation2 + $0xc8] sm:$0xff] %vm213, 0.0
          %240 = vst.msk [vmem:[#allocation2 + $0xd0] sm:$0xff] %vm213, 0.0
          %241 = vst.msk [vmem:[#allocation2 + $0xd8] sm:$0xff] %vm213, 0.0
          %242 = vst.msk [vmem:[#allocation2 + $0xe0] sm:$0xff] %vm213, 0.0
          %243 = vst.msk [vmem:[#allocation2 + $0xe8] sm:$0xff] %vm213, 0.0
          %244 = vst.msk [vmem:[#allocation2 + $0xf0] sm:$0xff] %vm213, 0.0
          %245 = vst.msk [vmem:[#allocation2 + $0xf8] sm:$0xff] %vm213, 0.0
        $region40: #{tpu_custom_call.1} parent=31 // pred_fallthru
          _
        %v246 = vld [vmem:[%s183] sm:$0xff]
        %v247 = vld [vmem:[%s183 + $0x8] sm:$0xff]
        %v248 = vld [vmem:[%s183 + $0x10] sm:$0xff]
        %v249 = vld [vmem:[%s183 + $0x18] sm:$0xff]
        %v250 = vld [vmem:[%s183 + $0x20] sm:$0xff]
        %v251 = vld [vmem:[%s183 + $0x28] sm:$0xff]
        %v252 = vld [vmem:[%s183 + $0x30] sm:$0xff]
        %v253 = vld [vmem:[%s183 + $0x38] sm:$0xff]
        %v254 = vld [vmem:[%s183 + $0x40] sm:$0xff]
        %v255 = vld [vmem:[%s183 + $0x48] sm:$0xff]
        %v256 = vld [vmem:[%s183 + $0x50] sm:$0xff]
        %v257 = vld [vmem:[%s183 + $0x58] sm:$0xff]
        %v258 = vld [vmem:[%s183 + $0x60] sm:$0xff]
        %v259 = vld [vmem:[%s183 + $0x68] sm:$0xff]
        %v260 = vld [vmem:[%s183 + $0x70] sm:$0xff]
        %v261 = vld [vmem:[%s183 + $0x78] sm:$0xff]
        %v262 = vld [vmem:[%s183 + $0x80] sm:$0xff]
        %v263 = vld [vmem:[%s183 + $0x88] sm:$0xff]
        %v264 = vld [vmem:[%s183 + $0x90] sm:$0xff]
        %v265 = vld [vmem:[%s183 + $0x98] sm:$0xff]
        %v266 = vld [vmem:[%s183 + $0xa0] sm:$0xff]
        %v267 = vld [vmem:[%s183 + $0xa8] sm:$0xff]
        %v268 = vld [vmem:[%s183 + $0xb0] sm:$0xff]
        %v269 = vld [vmem:[%s183 + $0xb8] sm:$0xff]
        %v270 = vld [vmem:[%s183 + $0xc0] sm:$0xff]
        %v271 = vld [vmem:[%s183 + $0xc8] sm:$0xff]
        %v272 = vld [vmem:[%s183 + $0xd0] sm:$0xff]
        %v273 = vld [vmem:[%s183 + $0xd8] sm:$0xff]
        %v274 = vld [vmem:[%s183 + $0xe0] sm:$0xff]
        %v275 = vld [vmem:[%s183 + $0xe8] sm:$0xff]
        %v276 = vld [vmem:[%s183 + $0xf0] sm:$0xff]
        %v277 = vld [vmem:[%s183 + $0xf8] sm:$0xff]
        %v278 = vld [vmem:[%s183 + $0x100] sm:$0xff]
        %v279 = vld [vmem:[%s183 + $0x108] sm:$0xff]
        %v280 = vld [vmem:[%s183 + $0x110] sm:$0xff]
        %v281 = vld [vmem:[%s183 + $0x118] sm:$0xff]
        %v282 = vld [vmem:[%s183 + $0x120] sm:$0xff]
        %v283 = vld [vmem:[%s183 + $0x128] sm:$0xff]
        %v284 = vld [vmem:[%s183 + $0x130] sm:$0xff]
        %v285 = vld [vmem:[%s183 + $0x138] sm:$0xff]
        %v286 = vld [vmem:[%s183 + $0x140] sm:$0xff]
        %v287 = vld [vmem:[%s183 + $0x148] sm:$0xff]
        %v288 = vld [vmem:[%s183 + $0x150] sm:$0xff]
        %v289 = vld [vmem:[%s183 + $0x158] sm:$0xff]
        %v290 = vld [vmem:[%s183 + $0x160] sm:$0xff]
        %v291 = vld [vmem:[%s183 + $0x168] sm:$0xff]
        %v292 = vld [vmem:[%s183 + $0x170] sm:$0xff]
        %v293 = vld [vmem:[%s183 + $0x178] sm:$0xff]
        %v294 = vld [vmem:[%s183 + $0x180] sm:$0xff]
        %v295 = vld [vmem:[%s183 + $0x188] sm:$0xff]
        %v296 = vld [vmem:[%s183 + $0x190] sm:$0xff]
        %v297 = vld [vmem:[%s183 + $0x198] sm:$0xff]
        %v298 = vld [vmem:[%s183 + $0x1a0] sm:$0xff]
        %v299 = vld [vmem:[%s183 + $0x1a8] sm:$0xff]
        %v300 = vld [vmem:[%s183 + $0x1b0] sm:$0xff]
        %v301 = vld [vmem:[%s183 + $0x1b8] sm:$0xff]
        %v302 = vld [vmem:[%s183 + $0x1c0] sm:$0xff]
        %v303 = vld [vmem:[%s183 + $0x1c8] sm:$0xff]
        %v304 = vld [vmem:[%s183 + $0x1d0] sm:$0xff]
        %v305 = vld [vmem:[%s183 + $0x1d8] sm:$0xff]
        %v306 = vld [vmem:[%s183 + $0x1e0] sm:$0xff]
        %v307 = vld [vmem:[%s183 + $0x1e8] sm:$0xff]
        %v308 = vld [vmem:[%s183 + $0x1f0] sm:$0xff]
        %v309 = vld [vmem:[%s183 + $0x1f8] sm:$0xff]
        %v310 = vld [vmem:[%s183 + $0x200] sm:$0xff]
        %v311 = vld [vmem:[%s183 + $0x208] sm:$0xff]
        %v312 = vld [vmem:[%s183 + $0x210] sm:$0xff]
        %v313 = vld [vmem:[%s183 + $0x218] sm:$0xff]
        %v314 = vld [vmem:[%s183 + $0x220] sm:$0xff]
        %v315 = vld [vmem:[%s183 + $0x228] sm:$0xff]
        %v316 = vld [vmem:[%s183 + $0x230] sm:$0xff]
        %v317 = vld [vmem:[%s183 + $0x238] sm:$0xff]
        %v318 = vld [vmem:[%s183 + $0x240] sm:$0xff]
        %v319 = vld [vmem:[%s183 + $0x248] sm:$0xff]
        %v320 = vld [vmem:[%s183 + $0x250] sm:$0xff]
        %v321 = vld [vmem:[%s183 + $0x258] sm:$0xff]
        %v322 = vld [vmem:[%s183 + $0x260] sm:$0xff]
        %v323 = vld [vmem:[%s183 + $0x268] sm:$0xff]
        %v324 = vld [vmem:[%s183 + $0x270] sm:$0xff]
        %v325 = vld [vmem:[%s183 + $0x278] sm:$0xff]
        %v326 = vld [vmem:[%s183 + $0x280] sm:$0xff]
        %v327 = vld [vmem:[%s183 + $0x288] sm:$0xff]
        %v328 = vld [vmem:[%s183 + $0x290] sm:$0xff]
        %v329 = vld [vmem:[%s183 + $0x298] sm:$0xff]
        %v330 = vld [vmem:[%s183 + $0x2a0] sm:$0xff]
        %v331 = vld [vmem:[%s183 + $0x2a8] sm:$0xff]
        %v332 = vld [vmem:[%s183 + $0x2b0] sm:$0xff]
        %v333 = vld [vmem:[%s183 + $0x2b8] sm:$0xff]
        %v334 = vld [vmem:[%s183 + $0x2c0] sm:$0xff]
        %v335 = vld [vmem:[%s183 + $0x2c8] sm:$0xff]
        %v336 = vld [vmem:[%s183 + $0x2d0] sm:$0xff]
        %v337 = vld [vmem:[%s183 + $0x2d8] sm:$0xff]
        %v338 = vld [vmem:[%s183 + $0x2e0] sm:$0xff]
        %v339 = vld [vmem:[%s183 + $0x2e8] sm:$0xff]
        %v340 = vld [vmem:[%s183 + $0x2f0] sm:$0xff]
        %v341 = vld [vmem:[%s183 + $0x2f8] sm:$0xff]
        %v342 = vld [vmem:[%s183 + $0x300] sm:$0xff]
        %v343 = vld [vmem:[%s183 + $0x308] sm:$0xff]
        %v344 = vld [vmem:[%s183 + $0x310] sm:$0xff]
        %v345 = vld [vmem:[%s183 + $0x318] sm:$0xff]
        %v346 = vld [vmem:[%s183 + $0x320] sm:$0xff]
        %v347 = vld [vmem:[%s183 + $0x328] sm:$0xff]
        %v348 = vld [vmem:[%s183 + $0x330] sm:$0xff]
        %v349 = vld [vmem:[%s183 + $0x338] sm:$0xff]
        %v350 = vld [vmem:[%s183 + $0x340] sm:$0xff]
        %v351 = vld [vmem:[%s183 + $0x348] sm:$0xff]
        %v352 = vld [vmem:[%s183 + $0x350] sm:$0xff]
        %v353 = vld [vmem:[%s183 + $0x358] sm:$0xff]
        %v354 = vld [vmem:[%s183 + $0x360] sm:$0xff]
        %v355 = vld [vmem:[%s183 + $0x368] sm:$0xff]
        %v356 = vld [vmem:[%s183 + $0x370] sm:$0xff]
        %v357 = vld [vmem:[%s183 + $0x378] sm:$0xff]
        %v358 = vld [vmem:[%s183 + $0x380] sm:$0xff]
        %v359 = vld [vmem:[%s183 + $0x388] sm:$0xff]
        %v360 = vld [vmem:[%s183 + $0x390] sm:$0xff]
        %v361 = vld [vmem:[%s183 + $0x398] sm:$0xff]
        %v362 = vld [vmem:[%s183 + $0x3a0] sm:$0xff]
        %v363 = vld [vmem:[%s183 + $0x3a8] sm:$0xff]
        %v364 = vld [vmem:[%s183 + $0x3b0] sm:$0xff]
        %v365 = vld [vmem:[%s183 + $0x3b8] sm:$0xff]
        %v366 = vld [vmem:[%s183 + $0x3c0] sm:$0xff]
        %v367 = vld [vmem:[%s183 + $0x3c8] sm:$0xff]
        %v368 = vld [vmem:[%s183 + $0x3d0] sm:$0xff]
        %v369 = vld [vmem:[%s183 + $0x3d8] sm:$0xff]
        %v370 = vld [vmem:[%s183 + $0x3e0] sm:$0xff]
        %v371 = vld [vmem:[%s183 + $0x3e8] sm:$0xff]
        %v372 = vld [vmem:[%s183 + $0x3f0] sm:$0xff]
        %v373 = vld [vmem:[%s183 + $0x3f8] sm:$0xff]
        %s374 = smul.u32 %s25, 512
        %s375 = scalar_lea.vmem %s1, %s374
        %v376 = vld [vmem:[%s375] sm:$0xff]
        %v377 = vld [vmem:[%s375 + $0x8] sm:$0xff]
        %v378 = vld [vmem:[%s375 + $0x10] sm:$0xff]
        %v379 = vld [vmem:[%s375 + $0x18] sm:$0xff]
        %v380 = vld [vmem:[%s375 + $0x20] sm:$0xff]
        %v381 = vld [vmem:[%s375 + $0x28] sm:$0xff]
        %v382 = vld [vmem:[%s375 + $0x30] sm:$0xff]
        %v383 = vld [vmem:[%s375 + $0x38] sm:$0xff]
        %v384 = vld [vmem:[%s375 + $0x40] sm:$0xff]
        %v385 = vld [vmem:[%s375 + $0x48] sm:$0xff]
        %v386 = vld [vmem:[%s375 + $0x50] sm:$0xff]
        %v387 = vld [vmem:[%s375 + $0x58] sm:$0xff]
        %v388 = vld [vmem:[%s375 + $0x60] sm:$0xff]
        %v389 = vld [vmem:[%s375 + $0x68] sm:$0xff]
        %v390 = vld [vmem:[%s375 + $0x70] sm:$0xff]
        %v391 = vld [vmem:[%s375 + $0x78] sm:$0xff]
        %v392 = vld [vmem:[%s375 + $0x80] sm:$0xff]
        %v393 = vld [vmem:[%s375 + $0x88] sm:$0xff]
        %v394 = vld [vmem:[%s375 + $0x90] sm:$0xff]
        %v395 = vld [vmem:[%s375 + $0x98] sm:$0xff]
        %v396 = vld [vmem:[%s375 + $0xa0] sm:$0xff]
        %v397 = vld [vmem:[%s375 + $0xa8] sm:$0xff]
        %v398 = vld [vmem:[%s375 + $0xb0] sm:$0xff]
        %v399 = vld [vmem:[%s375 + $0xb8] sm:$0xff]
        %v400 = vld [vmem:[%s375 + $0xc0] sm:$0xff]
        %v401 = vld [vmem:[%s375 + $0xc8] sm:$0xff]
        %v402 = vld [vmem:[%s375 + $0xd0] sm:$0xff]
        %v403 = vld [vmem:[%s375 + $0xd8] sm:$0xff]
        %v404 = vld [vmem:[%s375 + $0xe0] sm:$0xff]
        %v405 = vld [vmem:[%s375 + $0xe8] sm:$0xff]
        %v406 = vld [vmem:[%s375 + $0xf0] sm:$0xff]
        %v407 = vld [vmem:[%s375 + $0xf8] sm:$0xff]
        %v408 = vld [vmem:[%s375 + $0x100] sm:$0xff]
        %v409 = vld [vmem:[%s375 + $0x108] sm:$0xff]
        %v410 = vld [vmem:[%s375 + $0x110] sm:$0xff]
        %v411 = vld [vmem:[%s375 + $0x118] sm:$0xff]
        %v412 = vld [vmem:[%s375 + $0x120] sm:$0xff]
        %v413 = vld [vmem:[%s375 + $0x128] sm:$0xff]
        %v414 = vld [vmem:[%s375 + $0x130] sm:$0xff]
        %v415 = vld [vmem:[%s375 + $0x138] sm:$0xff]
        %v416 = vld [vmem:[%s375 + $0x140] sm:$0xff]
        %v417 = vld [vmem:[%s375 + $0x148] sm:$0xff]
        %v418 = vld [vmem:[%s375 + $0x150] sm:$0xff]
        %v419 = vld [vmem:[%s375 + $0x158] sm:$0xff]
        %v420 = vld [vmem:[%s375 + $0x160] sm:$0xff]
        %v421 = vld [vmem:[%s375 + $0x168] sm:$0xff]
        %v422 = vld [vmem:[%s375 + $0x170] sm:$0xff]
        %v423 = vld [vmem:[%s375 + $0x178] sm:$0xff]
        %v424 = vld [vmem:[%s375 + $0x180] sm:$0xff]
        %v425 = vld [vmem:[%s375 + $0x188] sm:$0xff]
        %v426 = vld [vmem:[%s375 + $0x190] sm:$0xff]
        %v427 = vld [vmem:[%s375 + $0x198] sm:$0xff]
        %v428 = vld [vmem:[%s375 + $0x1a0] sm:$0xff]
        %v429 = vld [vmem:[%s375 + $0x1a8] sm:$0xff]
        %v430 = vld [vmem:[%s375 + $0x1b0] sm:$0xff]
        %v431 = vld [vmem:[%s375 + $0x1b8] sm:$0xff]
        %v432 = vld [vmem:[%s375 + $0x1c0] sm:$0xff]
        %v433 = vld [vmem:[%s375 + $0x1c8] sm:$0xff]
        %v434 = vld [vmem:[%s375 + $0x1d0] sm:$0xff]
        %v435 = vld [vmem:[%s375 + $0x1d8] sm:$0xff]
        %v436 = vld [vmem:[%s375 + $0x1e0] sm:$0xff]
        %v437 = vld [vmem:[%s375 + $0x1e8] sm:$0xff]
        %v438 = vld [vmem:[%s375 + $0x1f0] sm:$0xff]
        %v439 = vld [vmem:[%s375 + $0x1f8] sm:$0xff]
        %v440 = vld [vmem:[#allocation2] sm:$0xff]
        %v441 = vld [vmem:[#allocation2 + $0x8] sm:$0xff]
        %v442 = vld [vmem:[#allocation2 + $0x10] sm:$0xff]
        %v443 = vld [vmem:[#allocation2 + $0x18] sm:$0xff]
        %v444 = vld [vmem:[#allocation2 + $0x20] sm:$0xff]
        %v445 = vld [vmem:[#allocation2 + $0x28] sm:$0xff]
        %v446 = vld [vmem:[#allocation2 + $0x30] sm:$0xff]
        %v447 = vld [vmem:[#allocation2 + $0x38] sm:$0xff]
        %v448 = vld [vmem:[#allocation2 + $0x40] sm:$0xff]
        %v449 = vld [vmem:[#allocation2 + $0x48] sm:$0xff]
        %v450 = vld [vmem:[#allocation2 + $0x50] sm:$0xff]
        %v451 = vld [vmem:[#allocation2 + $0x58] sm:$0xff]
        %v452 = vld [vmem:[#allocation2 + $0x60] sm:$0xff]
        %v453 = vld [vmem:[#allocation2 + $0x68] sm:$0xff]
        %v454 = vld [vmem:[#allocation2 + $0x70] sm:$0xff]
        %v455 = vld [vmem:[#allocation2 + $0x78] sm:$0xff]
        %v456 = vld [vmem:[#allocation2 + $0x80] sm:$0xff]
        %v457 = vld [vmem:[#allocation2 + $0x88] sm:$0xff]
        %v458 = vld [vmem:[#allocation2 + $0x90] sm:$0xff]
        %v459 = vld [vmem:[#allocation2 + $0x98] sm:$0xff]
        %v460 = vld [vmem:[#allocation2 + $0xa0] sm:$0xff]
        %v461 = vld [vmem:[#allocation2 + $0xa8] sm:$0xff]
        %v462 = vld [vmem:[#allocation2 + $0xb0] sm:$0xff]
        %v463 = vld [vmem:[#allocation2 + $0xb8] sm:$0xff]
        %v464 = vld [vmem:[#allocation2 + $0xc0] sm:$0xff]
        %v465 = vld [vmem:[#allocation2 + $0xc8] sm:$0xff]
        %v466 = vld [vmem:[#allocation2 + $0xd0] sm:$0xff]
        %v467 = vld [vmem:[#allocation2 + $0xd8] sm:$0xff]
        %v468 = vld [vmem:[#allocation2 + $0xe0] sm:$0xff]
        %v469 = vld [vmem:[#allocation2 + $0xe8] sm:$0xff]
        %v470 = vld [vmem:[#allocation2 + $0xf0] sm:$0xff]
        %v471 = vld [vmem:[#allocation2 + $0xf8] sm:$0xff]
        %472 = vmatprep.subr.mxu0 0.0
        %473 = vmatpush1.msra.mxu0 %v376
        %474 = vmatprep.subr.mxu0 0.0
        %475 = vmatpush1.msra.mxu0 %v377
        %476 = vmatprep.subr.mxu0 0.0
        %477 = vmatpush1.msra.mxu0 %v378
        %478 = vmatprep.subr.mxu0 0.0
        %479 = vmatpush1.msra.mxu0 %v379
        %480 = vmatprep.subr.mxu0 0.0
        %481 = vmatpush1.msra.mxu0 %v380
        %482 = vmatprep.subr.mxu0 0.0
        %483 = vmatpush1.msra.mxu0 %v381
        %484 = vmatprep.subr.mxu0 0.0
        %485 = vmatpush1.msra.mxu0 %v382
        %486 = vmatprep.subr.mxu0 0.0
        %487 = vmatpush1.msra.mxu0 %v383
        %488 = vmatprep.subr.mxu0 0.0
        %489 = vmatpush1.msra.mxu0 %v384
        %490 = vmatprep.subr.mxu0 0.0
        %491 = vmatpush1.msra.mxu0 %v385
        %492 = vmatprep.subr.mxu0 0.0
        %493 = vmatpush1.msra.mxu0 %v386
        %494 = vmatprep.subr.mxu0 0.0
        %495 = vmatpush1.msra.mxu0 %v387
        %496 = vmatprep.subr.mxu0 0.0
        %497 = vmatpush1.msra.mxu0 %v388
        %498 = vmatprep.subr.mxu0 0.0
        %499 = vmatpush1.msra.mxu0 %v389
        %500 = vmatprep.subr.mxu0 0.0
        %501 = vmatpush1.msra.mxu0 %v390
        %502 = vmatprep.subr.mxu0 0.0
        %503 = vmatpush1.msra.mxu0 %v391
        %504 = vmatprep.subr.mxu0 0.0
        %505 = vmatpush1.msra.mxu0 %v392
        %506 = vmatprep.subr.mxu0 0.0
        %507 = vmatpush1.msra.mxu0 %v393
        %508 = vmatprep.subr.mxu0 0.0
        %509 = vmatpush1.msra.mxu0 %v394
        %510 = vmatprep.subr.mxu0 0.0
        %511 = vmatpush1.msra.mxu0 %v395
        %512 = vmatprep.subr.mxu0 0.0
        %513 = vmatpush1.msra.mxu0 %v396
        %514 = vmatprep.subr.mxu0 0.0
        %515 = vmatpush1.msra.mxu0 %v397
        %516 = vmatprep.subr.mxu0 0.0
        %517 = vmatpush1.msra.mxu0 %v398
        %518 = vmatprep.subr.mxu0 0.0
        %519 = vmatpush1.msra.mxu0 %v399
        %520 = vmatprep.subr.mxu0 0.0
        %521 = vmatpush1.msra.mxu0 %v400
        %522 = vmatprep.subr.mxu0 0.0
        %523 = vmatpush1.msra.mxu0 %v401
        %524 = vmatprep.subr.mxu0 0.0
        %525 = vmatpush1.msra.mxu0 %v402
        %526 = vmatprep.subr.mxu0 0.0
        %527 = vmatpush1.msra.mxu0 %v403
        %528 = vmatprep.subr.mxu0 0.0
        %529 = vmatpush1.msra.mxu0 %v404
        %530 = vmatprep.subr.mxu0 0.0
        %531 = vmatpush1.msra.mxu0 %v405
        %532 = vmatprep.subr.mxu0 0.0
        %533 = vmatpush1.msra.mxu0 %v406
        %534 = vmatprep.subr.mxu0 0.0
        %535 = vmatpush1.msra.mxu0 %v407
        %536 = vmatprep.mubr.f32.mxu0 %v247
        %537 = vmatmul.mubr.f32.gmra.mrb[0].mxu0 %v246
        %v538 = vpop.f32.mrb[0].mxu0
        %v539 = vadd.f32 0.0, %v538
        %v540 = vpop.f32.mrb[0].mxu0
        %541 = vmatprep.mubr.f32.mxu0 %v251
        %542 = vmatmul.mubr.f32.gmra.mrb[0].mxu0 %v250
        %v543 = vpop.f32.mrb[0].mxu0
        %v544 = vadd.f32 0.0, %v543
        %v545 = vpop.f32.mrb[0].mxu0
        %546 = vmatprep.mubr.f32.mxu0 %v255
        %547 = vmatmul.mubr.f32.gmra.mrb[0].mxu0 %v254
        %v548 = vpop.f32.mrb[0].mxu0
        %v549 = vadd.f32 0.0, %v548
        %v550 = vpop.f32.mrb[0].mxu0
        %551 = vmatprep.mubr.f32.mxu0 %v259
        %552 = vmatmul.mubr.f32.gmra.mrb[0].mxu0 %v258
        %v553 = vpop.f32.mrb[0].mxu0
        %v554 = vadd.f32 0.0, %v553
        %v555 = vpop.f32.mrb[0].mxu0
        %556 = vmatprep.mubr.f32.mxu0 %v263
        %557 = vmatmul.mubr.f32.gmra.mrb[0].mxu0 %v262
        %v558 = vpop.f32.mrb[0].mxu0
        %v559 = vadd.f32 0.0, %v558
        %v560 = vpop.f32.mrb[0].mxu0
        %561 = vmatprep.mubr.f32.mxu0 %v267
        %562 = vmatmul.mubr.f32.gmra.mrb[0].mxu0 %v266
        %v563 = vpop.f32.mrb[0].mxu0
        %v564 = vadd.f32 0.0, %v563
        %v565 = vpop.f32.mrb[0].mxu0
        %566 = vmatprep.mubr.f32.mxu0 %v271
        %567 = vmatmul.mubr.f32.gmra.mrb[0].mxu0 %v270
        %v568 = vpop.f32.mrb[0].mxu0
        %v569 = vadd.f32 0.0, %v568
        %v570 = vpop.f32.mrb[0].mxu0
        %571 = vmatprep.mubr.f32.mxu0 %v275
        %572 = vmatmul.mubr.f32.gmra.mrb[0].mxu0 %v274
        %v573 = vpop.f32.mrb[0].mxu0
        %v574 = vadd.f32 0.0, %v573
        %v575 = vpop.f32.mrb[0].mxu0
        %576 = vmatprep.mubr.f32.mxu0 %v279
        %577 = vmatmul.mubr.f32.gmra.mrb[0].mxu0 %v278
        %v578 = vpop.f32.mrb[0].mxu0
        %v579 = vadd.f32 0.0, %v578
        %v580 = vpop.f32.mrb[0].mxu0
        %581 = vmatprep.mubr.f32.mxu0 %v283
        %582 = vmatmul.mubr.f32.gmra.mrb[0].mxu0 %v282
        %v583 = vpop.f32.mrb[0].mxu0
        %v584 = vadd.f32 0.0, %v583
        %v585 = vpop.f32.mrb[0].mxu0
        %586 = vmatprep.mubr.f32.mxu0 %v287
        %587 = vmatmul.mubr.f32.gmra.mrb[0].mxu0 %v286
        %v588 = vpop.f32.mrb[0].mxu0
        %v589 = vadd.f32 0.0, %v588
        %v590 = vpop.f32.mrb[0].mxu0
        %591 = vmatprep.mubr.f32.mxu0 %v291
        %592 = vmatmul.mubr.f32.gmra.mrb[0].mxu0 %v290
        %v593 = vpop.f32.mrb[0].mxu0
        %v594 = vadd.f32 0.0, %v593
        %v595 = vpop.f32.mrb[0].mxu0
        %596 = vmatprep.mubr.f32.mxu0 %v295
        %597 = vmatmul.mubr.f32.gmra.mrb[0].mxu0 %v294
        %v598 = vpop.f32.mrb[0].mxu0
        %v599 = vadd.f32 0.0, %v598
        %v600 = vpop.f32.mrb[0].mxu0
        %601 = vmatprep.mubr.f32.mxu0 %v299
        %602 = vmatmul.mubr.f32.gmra.mrb[0].mxu0 %v298
        %v603 = vpop.f32.mrb[0].mxu0
        %v604 = vadd.f32 0.0, %v603
        %v605 = vpop.f32.mrb[0].mxu0
        %606 = vmatprep.mubr.f32.mxu0 %v303
        %607 = vmatmul.mubr.f32.gmra.mrb[0].mxu0 %v302
        %v608 = vpop.f32.mrb[0].mxu0
        %v609 = vadd.f32 0.0, %v608
        %v610 = vpop.f32.mrb[0].mxu0
        %611 = vmatprep.mubr.f32.mxu0 %v307
        %612 = vmatmul.mubr.f32.gmra.mrb[0].mxu0 %v306
        %v613 = vpop.f32.mrb[0].mxu0
        %v614 = vadd.f32 0.0, %v613
        %v615 = vpop.f32.mrb[0].mxu0
        %616 = vmatprep.mubr.f32.mxu0 %v311
        %617 = vmatmul.mubr.f32.gmra.mrb[0].mxu0 %v310
        %v618 = vpop.f32.mrb[0].mxu0
        %v619 = vadd.f32 0.0, %v618
        %v620 = vpop.f32.mrb[0].mxu0
        %621 = vmatprep.mubr.f32.mxu0 %v315
        %622 = vmatmul.mubr.f32.gmra.mrb[0].mxu0 %v314
        %v623 = vpop.f32.mrb[0].mxu0
        %v624 = vadd.f32 0.0, %v623
        %v625 = vpop.f32.mrb[0].mxu0
        %626 = vmatprep.mubr.f32.mxu0 %v319
        %627 = vmatmul.mubr.f32.gmra.mrb[0].mxu0 %v318
        %v628 = vpop.f32.mrb[0].mxu0
        %v629 = vadd.f32 0.0, %v628
        %v630 = vpop.f32.mrb[0].mxu0
        %631 = vmatprep.mubr.f32.mxu0 %v323
        %632 = vmatmul.mubr.f32.gmra.mrb[0].mxu0 %v322
        %v633 = vpop.f32.mrb[0].mxu0
        %v634 = vadd.f32 0.0, %v633
        %v635 = vpop.f32.mrb[0].mxu0
        %636 = vmatprep.mubr.f32.mxu0 %v327
        %637 = vmatmul.mubr.f32.gmra.mrb[0].mxu0 %v326
        %v638 = vpop.f32.mrb[0].mxu0
        %v639 = vadd.f32 0.0, %v638
        %v640 = vpop.f32.mrb[0].mxu0
        %641 = vmatprep.mubr.f32.mxu0 %v331
        %642 = vmatmul.mubr.f32.gmra.mrb[0].mxu0 %v330
        %v643 = vpop.f32.mrb[0].mxu0
        %v644 = vadd.f32 0.0, %v643
        %v645 = vpop.f32.mrb[0].mxu0
        %646 = vmatprep.mubr.f32.mxu0 %v335
        %647 = vmatmul.mubr.f32.gmra.mrb[0].mxu0 %v334
        %v648 = vpop.f32.mrb[0].mxu0
        %v649 = vadd.f32 0.0, %v648
        %v650 = vpop.f32.mrb[0].mxu0
        %651 = vmatprep.mubr.f32.mxu0 %v339
        %652 = vmatmul.mubr.f32.gmra.mrb[0].mxu0 %v338
        %v653 = vpop.f32.mrb[0].mxu0
        %v654 = vadd.f32 0.0, %v653
        %v655 = vpop.f32.mrb[0].mxu0
        %656 = vmatprep.mubr.f32.mxu0 %v343
        %657 = vmatmul.mubr.f32.gmra.mrb[0].mxu0 %v342
        %v658 = vpop.f32.mrb[0].mxu0
        %v659 = vadd.f32 0.0, %v658
        %v660 = vpop.f32.mrb[0].mxu0
        %661 = vmatprep.mubr.f32.mxu0 %v347
        %662 = vmatmul.mubr.f32.gmra.mrb[0].mxu0 %v346
        %v663 = vpop.f32.mrb[0].mxu0
        %v664 = vadd.f32 0.0, %v663
        %v665 = vpop.f32.mrb[0].mxu0
        %666 = vmatprep.mubr.f32.mxu0 %v351
        %667 = vmatmul.mubr.f32.gmra.mrb[0].mxu0 %v350
        %v668 = vpop.f32.mrb[0].mxu0
        %v669 = vadd.f32 0.0, %v668
        %v670 = vpop.f32.mrb[0].mxu0
        %671 = vmatprep.mubr.f32.mxu0 %v355
        %672 = vmatmul.mubr.f32.gmra.mrb[0].mxu0 %v354
        %v673 = vpop.f32.mrb[0].mxu0
        %v674 = vadd.f32 0.0, %v673
        %v675 = vpop.f32.mrb[0].mxu0
        %676 = vmatprep.mubr.f32.mxu0 %v359
        %677 = vmatmul.mubr.f32.gmra.mrb[0].mxu0 %v358
        %v678 = vpop.f32.mrb[0].mxu0
        %v679 = vadd.f32 0.0, %v678
        %v680 = vpop.f32.mrb[0].mxu0
        %681 = vmatprep.mubr.f32.mxu0 %v363
        %682 = vmatmul.mubr.f32.gmra.mrb[0].mxu0 %v362
        %v683 = vpop.f32.mrb[0].mxu0
        %v684 = vadd.f32 0.0, %v683
        %v685 = vpop.f32.mrb[0].mxu0
        %686 = vmatprep.mubr.f32.mxu0 %v367
        %687 = vmatmul.mubr.f32.gmra.mrb[0].mxu0 %v366
        %v688 = vpop.f32.mrb[0].mxu0
        %v689 = vadd.f32 0.0, %v688
        %v690 = vpop.f32.mrb[0].mxu0
        %691 = vmatprep.mubr.f32.mxu0 %v371
        %692 = vmatmul.mubr.f32.gmra.mrb[0].mxu0 %v370
        %v693 = vpop.f32.mrb[0].mxu0
        %v694 = vadd.f32 0.0, %v693
        %v695 = vpop.f32.mrb[0].mxu0
        %696 = vdwg.mxu0
        %697 = vmatprep.subr.mxu0 0.0
        %698 = vmatpush1.msra.mxu0 %v408
        %699 = vmatprep.subr.mxu0 0.0
        %700 = vmatpush1.msra.mxu0 %v409
        %701 = vmatprep.subr.mxu0 0.0
        %702 = vmatpush1.msra.mxu0 %v410
        %703 = vmatprep.subr.mxu0 0.0
        %704 = vmatpush1.msra.mxu0 %v411
        %705 = vmatprep.subr.mxu0 0.0
        %706 = vmatpush1.msra.mxu0 %v412
        %707 = vmatprep.subr.mxu0 0.0
        %708 = vmatpush1.msra.mxu0 %v413
        %709 = vmatprep.subr.mxu0 0.0
        %710 = vmatpush1.msra.mxu0 %v414
        %711 = vmatprep.subr.mxu0 0.0
        %712 = vmatpush1.msra.mxu0 %v415
        %713 = vmatprep.subr.mxu0 0.0
        %714 = vmatpush1.msra.mxu0 %v416
        %715 = vmatprep.subr.mxu0 0.0
        %716 = vmatpush1.msra.mxu0 %v417
        %717 = vmatprep.subr.mxu0 0.0
        %718 = vmatpush1.msra.mxu0 %v418
        %719 = vmatprep.subr.mxu0 0.0
        %720 = vmatpush1.msra.mxu0 %v419
        %721 = vmatprep.subr.mxu0 0.0
        %722 = vmatpush1.msra.mxu0 %v420
        %723 = vmatprep.subr.mxu0 0.0
        %724 = vmatpush1.msra.mxu0 %v421
        %725 = vmatprep.subr.mxu0 0.0
        %726 = vmatpush1.msra.mxu0 %v422
        %727 = vmatprep.subr.mxu0 0.0
        %728 = vmatpush1.msra.mxu0 %v423
        %729 = vmatprep.subr.mxu0 0.0
        %730 = vmatpush1.msra.mxu0 %v424
        %731 = vmatprep.subr.mxu0 0.0
        %732 = vmatpush1.msra.mxu0 %v425
        %733 = vmatprep.subr.mxu0 0.0
        %734 = vmatpush1.msra.mxu0 %v426
        %735 = vmatprep.subr.mxu0 0.0
        %736 = vmatpush1.msra.mxu0 %v427
        %737 = vmatprep.subr.mxu0 0.0
        %738 = vmatpush1.msra.mxu0 %v428
        %739 = vmatprep.subr.mxu0 0.0
        %740 = vmatpush1.msra.mxu0 %v429
        %741 = vmatprep.subr.mxu0 0.0
        %742 = vmatpush1.msra.mxu0 %v430
        %743 = vmatprep.subr.mxu0 0.0
        %744 = vmatpush1.msra.mxu0 %v431
        %745 = vmatprep.subr.mxu0 0.0
        %746 = vmatpush1.msra.mxu0 %v432
        %747 = vmatprep.subr.mxu0 0.0
        %748 = vmatpush1.msra.mxu0 %v433
        %749 = vmatprep.subr.mxu0 0.0
        %750 = vmatpush1.msra.mxu0 %v434
        %751 = vmatprep.subr.mxu0 0.0
        %752 = vmatpush1.msra.mxu0 %v435
        %753 = vmatprep.subr.mxu0 0.0
        %754 = vmatpush1.msra.mxu0 %v436
        %755 = vmatprep.subr.mxu0 0.0
        %756 = vmatpush1.msra.mxu0 %v437
        %757 = vmatprep.subr.mxu0 0.0
        %758 = vmatpush1.msra.mxu0 %v438
        %759 = vmatprep.subr.mxu0 0.0
        %760 = vmatpush1.msra.mxu0 %v439
        %761 = vmatprep.mubr.f32.mxu0 %v249
        %762 = vmatmul.mubr.f32.gmra.mrb[0].mxu0 %v248
        %v763 = vpop.f32.mrb[0].mxu0
        %v764 = vadd.f32 %v539, %v763
        %v765 = vpop.f32.mrb[0].mxu0
        %766 = vmatprep.mubr.f32.mxu0 %v253
        %767 = vmatmul.mubr.f32.gmra.mrb[0].mxu0 %v252
        %v768 = vpop.f32.mrb[0].mxu0
        %v769 = vadd.f32 %v544, %v768
        %v770 = vpop.f32.mrb[0].mxu0
        %771 = vmatprep.mubr.f32.mxu0 %v257
        %772 = vmatmul.mubr.f32.gmra.mrb[0].mxu0 %v256
        %v773 = vpop.f32.mrb[0].mxu0
        %v774 = vadd.f32 %v549, %v773
        %v775 = vpop.f32.mrb[0].mxu0
        %776 = vmatprep.mubr.f32.mxu0 %v261
        %777 = vmatmul.mubr.f32.gmra.mrb[0].mxu0 %v260
        %v778 = vpop.f32.mrb[0].mxu0
        %v779 = vadd.f32 %v554, %v778
        %v780 = vpop.f32.mrb[0].mxu0
        %781 = vmatprep.mubr.f32.mxu0 %v265
        %782 = vmatmul.mubr.f32.gmra.mrb[0].mxu0 %v264
        %v783 = vpop.f32.mrb[0].mxu0
        %v784 = vadd.f32 %v559, %v783
        %v785 = vpop.f32.mrb[0].mxu0
        %786 = vmatprep.mubr.f32.mxu0 %v269
        %787 = vmatmul.mubr.f32.gmra.mrb[0].mxu0 %v268
        %v788 = vpop.f32.mrb[0].mxu0
        %v789 = vadd.f32 %v564, %v788
        %v790 = vpop.f32.mrb[0].mxu0
        %791 = vmatprep.mubr.f32.mxu0 %v273
        %792 = vmatmul.mubr.f32.gmra.mrb[0].mxu0 %v272
        %v793 = vpop.f32.mrb[0].mxu0
        %v794 = vadd.f32 %v569, %v793
        %v795 = vpop.f32.mrb[0].mxu0
        %796 = vmatprep.mubr.f32.mxu0 %v277
        %797 = vmatmul.mubr.f32.gmra.mrb[0].mxu0 %v276
        %v798 = vpop.f32.mrb[0].mxu0
        %v799 = vadd.f32 %v574, %v798
        %v800 = vpop.f32.mrb[0].mxu0
        %801 = vmatprep.mubr.f32.mxu0 %v281
        %802 = vmatmul.mubr.f32.gmra.mrb[0].mxu0 %v280
        %v803 = vpop.f32.mrb[0].mxu0
        %v804 = vadd.f32 %v579, %v803
        %v805 = vpop.f32.mrb[0].mxu0
        %806 = vmatprep.mubr.f32.mxu0 %v285
        %807 = vmatmul.mubr.f32.gmra.mrb[0].mxu0 %v284
        %v808 = vpop.f32.mrb[0].mxu0
        %v809 = vadd.f32 %v584, %v808
        %v810 = vpop.f32.mrb[0].mxu0
        %811 = vmatprep.mubr.f32.mxu0 %v289
        %812 = vmatmul.mubr.f32.gmra.mrb[0].mxu0 %v288
        %v813 = vpop.f32.mrb[0].mxu0
        %v814 = vadd.f32 %v589, %v813
        %v815 = vpop.f32.mrb[0].mxu0
        %816 = vmatprep.mubr.f32.mxu0 %v293
        %817 = vmatmul.mubr.f32.gmra.mrb[0].mxu0 %v292
        %v818 = vpop.f32.mrb[0].mxu0
        %v819 = vadd.f32 %v594, %v818
        %v820 = vpop.f32.mrb[0].mxu0
        %821 = vmatprep.mubr.f32.mxu0 %v297
        %822 = vmatmul.mubr.f32.gmra.mrb[0].mxu0 %v296
        %v823 = vpop.f32.mrb[0].mxu0
        %v824 = vadd.f32 %v599, %v823
        %v825 = vpop.f32.mrb[0].mxu0
        %826 = vmatprep.mubr.f32.mxu0 %v301
        %827 = vmatmul.mubr.f32.gmra.mrb[0].mxu0 %v300
        %v828 = vpop.f32.mrb[0].mxu0
        %v829 = vadd.f32 %v604, %v828
        %v830 = vpop.f32.mrb[0].mxu0
        %831 = vmatprep.mubr.f32.mxu0 %v305
        %832 = vmatmul.mubr.f32.gmra.mrb[0].mxu0 %v304
        %v833 = vpop.f32.mrb[0].mxu0
        %v834 = vadd.f32 %v609, %v833
        %v835 = vpop.f32.mrb[0].mxu0
        %836 = vmatprep.mubr.f32.mxu0 %v309
        %837 = vmatmul.mubr.f32.gmra.mrb[0].mxu0 %v308
        %v838 = vpop.f32.mrb[0].mxu0
        %v839 = vadd.f32 %v614, %v838
        %v840 = vpop.f32.mrb[0].mxu0
        %841 = vmatprep.mubr.f32.mxu0 %v313
        %842 = vmatmul.mubr.f32.gmra.mrb[0].mxu0 %v312
        %v843 = vpop.f32.mrb[0].mxu0
        %v844 = vadd.f32 %v619, %v843
        %v845 = vpop.f32.mrb[0].mxu0
        %846 = vmatprep.mubr.f32.mxu0 %v317
        %847 = vmatmul.mubr.f32.gmra.mrb[0].mxu0 %v316
        %v848 = vpop.f32.mrb[0].mxu0
        %v849 = vadd.f32 %v624, %v848
        %v850 = vpop.f32.mrb[0].mxu0
        %851 = vmatprep.mubr.f32.mxu0 %v321
        %852 = vmatmul.mubr.f32.gmra.mrb[0].mxu0 %v320
        %v853 = vpop.f32.mrb[0].mxu0
        %v854 = vadd.f32 %v629, %v853
        %v855 = vpop.f32.mrb[0].mxu0
        %856 = vmatprep.mubr.f32.mxu0 %v325
        %857 = vmatmul.mubr.f32.gmra.mrb[0].mxu0 %v324
        %v858 = vpop.f32.mrb[0].mxu0
        %v859 = vadd.f32 %v634, %v858
        %v860 = vpop.f32.mrb[0].mxu0
        %861 = vmatprep.mubr.f32.mxu0 %v329
        %862 = vmatmul.mubr.f32.gmra.mrb[0].mxu0 %v328
        %v863 = vpop.f32.mrb[0].mxu0
        %v864 = vadd.f32 %v639, %v863
        %v865 = vpop.f32.mrb[0].mxu0
        %866 = vmatprep.mubr.f32.mxu0 %v333
        %867 = vmatmul.mubr.f32.gmra.mrb[0].mxu0 %v332
        %v868 = vpop.f32.mrb[0].mxu0
        %v869 = vadd.f32 %v644, %v868
        %v870 = vpop.f32.mrb[0].mxu0
        %871 = vmatprep.mubr.f32.mxu0 %v337
        %872 = vmatmul.mubr.f32.gmra.mrb[0].mxu0 %v336
        %v873 = vpop.f32.mrb[0].mxu0
        %v874 = vadd.f32 %v649, %v873
        %v875 = vpop.f32.mrb[0].mxu0
        %876 = vmatprep.mubr.f32.mxu0 %v341
        %877 = vmatmul.mubr.f32.gmra.mrb[0].mxu0 %v340
        %v878 = vpop.f32.mrb[0].mxu0
        %v879 = vadd.f32 %v654, %v878
        %v880 = vpop.f32.mrb[0].mxu0
        %881 = vmatprep.mubr.f32.mxu0 %v345
        %882 = vmatmul.mubr.f32.gmra.mrb[0].mxu0 %v344
        %v883 = vpop.f32.mrb[0].mxu0
        %v884 = vadd.f32 %v659, %v883
        %v885 = vpop.f32.mrb[0].mxu0
        %886 = vmatprep.mubr.f32.mxu0 %v349
        %887 = vmatmul.mubr.f32.gmra.mrb[0].mxu0 %v348
        %v888 = vpop.f32.mrb[0].mxu0
        %v889 = vadd.f32 %v664, %v888
        %v890 = vpop.f32.mrb[0].mxu0
        %891 = vmatprep.mubr.f32.mxu0 %v353
        %892 = vmatmul.mubr.f32.gmra.mrb[0].mxu0 %v352
        %v893 = vpop.f32.mrb[0].mxu0
        %v894 = vadd.f32 %v669, %v893
        %v895 = vpop.f32.mrb[0].mxu0
        %896 = vmatprep.mubr.f32.mxu0 %v357
        %897 = vmatmul.mubr.f32.gmra.mrb[0].mxu0 %v356
        %v898 = vpop.f32.mrb[0].mxu0
        %v899 = vadd.f32 %v674, %v898
        %v900 = vpop.f32.mrb[0].mxu0
        %901 = vmatprep.mubr.f32.mxu0 %v361
        %902 = vmatmul.mubr.f32.gmra.mrb[0].mxu0 %v360
        %v903 = vpop.f32.mrb[0].mxu0
        %v904 = vadd.f32 %v679, %v903
        %v905 = vpop.f32.mrb[0].mxu0
        %906 = vmatprep.mubr.f32.mxu0 %v365
        %907 = vmatmul.mubr.f32.gmra.mrb[0].mxu0 %v364
        %v908 = vpop.f32.mrb[0].mxu0
        %v909 = vadd.f32 %v684, %v908
        %v910 = vpop.f32.mrb[0].mxu0
        %911 = vmatprep.mubr.f32.mxu0 %v369
        %912 = vmatmul.mubr.f32.gmra.mrb[0].mxu0 %v368
        %v913 = vpop.f32.mrb[0].mxu0
        %v914 = vadd.f32 %v689, %v913
        %v915 = vpop.f32.mrb[0].mxu0
        %916 = vmatprep.mubr.f32.mxu0 %v373
        %917 = vmatmul.mubr.f32.gmra.mrb[0].mxu0 %v372
        %v918 = vpop.f32.mrb[0].mxu0
        %v919 = vadd.f32 %v694, %v918
        %v920 = vpop.f32.mrb[0].mxu0
        %921 = vdwg.mxu0
        %v922 = vadd.f32 %v440, %v764
        %v923 = vadd.f32 %v441, %v769
        %v924 = vadd.f32 %v442, %v774
        %v925 = vadd.f32 %v443, %v779
        %v926 = vadd.f32 %v444, %v784
        %v927 = vadd.f32 %v445, %v789
        %v928 = vadd.f32 %v446, %v794
        %v929 = vadd.f32 %v447, %v799
        %v930 = vadd.f32 %v448, %v804
        %v931 = vadd.f32 %v449, %v809
        %v932 = vadd.f32 %v450, %v814
        %v933 = vadd.f32 %v451, %v819
        %v934 = vadd.f32 %v452, %v824
        %v935 = vadd.f32 %v453, %v829
        %v936 = vadd.f32 %v454, %v834
        %v937 = vadd.f32 %v455, %v839
        %v938 = vadd.f32 %v456, %v844
        %v939 = vadd.f32 %v457, %v849
        %v940 = vadd.f32 %v458, %v854
        %v941 = vadd.f32 %v459, %v859
        %v942 = vadd.f32 %v460, %v864
        %v943 = vadd.f32 %v461, %v869
        %v944 = vadd.f32 %v462, %v874
        %v945 = vadd.f32 %v463, %v879
        %v946 = vadd.f32 %v464, %v884
        %v947 = vadd.f32 %v465, %v889
        %v948 = vadd.f32 %v466, %v894
        %v949 = vadd.f32 %v467, %v899
        %v950 = vadd.f32 %v468, %v904
        %v951 = vadd.f32 %v469, %v909
        %v952 = vadd.f32 %v470, %v914
        %v953 = vadd.f32 %v471, %v919
        %vm954 = vcmask 523264
        %955 = vst.msk [vmem:[#allocation2] sm:$0xff] %vm954, %v922
        %956 = vst.msk [vmem:[#allocation2 + $0x8] sm:$0xff] %vm954, %v923
        %957 = vst.msk [vmem:[#allocation2 + $0x10] sm:$0xff] %vm954, %v924
        %958 = vst.msk [vmem:[#allocation2 + $0x18] sm:$0xff] %vm954, %v925
        %959 = vst.msk [vmem:[#allocation2 + $0x20] sm:$0xff] %vm954, %v926
        %960 = vst.msk [vmem:[#allocation2 + $0x28] sm:$0xff] %vm954, %v927
        %961 = vst.msk [vmem:[#allocation2 + $0x30] sm:$0xff] %vm954, %v928
        %962 = vst.msk [vmem:[#allocation2 + $0x38] sm:$0xff] %vm954, %v929
        %963 = vst.msk [vmem:[#allocation2 + $0x40] sm:$0xff] %vm954, %v930
        %964 = vst.msk [vmem:[#allocation2 + $0x48] sm:$0xff] %vm954, %v931
        %965 = vst.msk [vmem:[#allocation2 + $0x50] sm:$0xff] %vm954, %v932
        %966 = vst.msk [vmem:[#allocation2 + $0x58] sm:$0xff] %vm954, %v933
        %967 = vst.msk [vmem:[#allocation2 + $0x60] sm:$0xff] %vm954, %v934
        %968 = vst.msk [vmem:[#allocation2 + $0x68] sm:$0xff] %vm954, %v935
        %969 = vst.msk [vmem:[#allocation2 + $0x70] sm:$0xff] %vm954, %v936
        %970 = vst.msk [vmem:[#allocation2 + $0x78] sm:$0xff] %vm954, %v937
        %971 = vst.msk [vmem:[#allocation2 + $0x80] sm:$0xff] %vm954, %v938
        %972 = vst.msk [vmem:[#allocation2 + $0x88] sm:$0xff] %vm954, %v939
        %973 = vst.msk [vmem:[#allocation2 + $0x90] sm:$0xff] %vm954, %v940
        %974 = vst.msk [vmem:[#allocation2 + $0x98] sm:$0xff] %vm954, %v941
        %975 = vst.msk [vmem:[#allocation2 + $0xa0] sm:$0xff] %vm954, %v942
        %976 = vst.msk [vmem:[#allocation2 + $0xa8] sm:$0xff] %vm954, %v943
        %977 = vst.msk [vmem:[#allocation2 + $0xb0] sm:$0xff] %vm954, %v944
        %978 = vst.msk [vmem:[#allocation2 + $0xb8] sm:$0xff] %vm954, %v945
        %979 = vst.msk [vmem:[#allocation2 + $0xc0] sm:$0xff] %vm954, %v946
        %980 = vst.msk [vmem:[#allocation2 + $0xc8] sm:$0xff] %vm954, %v947
        %981 = vst.msk [vmem:[#allocation2 + $0xd0] sm:$0xff] %vm954, %v948
        %982 = vst.msk [vmem:[#allocation2 + $0xd8] sm:$0xff] %vm954, %v949
        %983 = vst.msk [vmem:[#allocation2 + $0xe0] sm:$0xff] %vm954, %v950
        %984 = vst.msk [vmem:[#allocation2 + $0xe8] sm:$0xff] %vm954, %v951
        %985 = vst.msk [vmem:[#allocation2 + $0xf0] sm:$0xff] %vm954, %v952
        %986 = vst.msk [vmem:[#allocation2 + $0xf8] sm:$0xff] %vm954, %v953
        // Predicated region
        $region41: #{tpu_custom_call.1} parent=31 // pred_check
          %p987 = pneg %p209
        $region42: #{tpu_custom_call.1} parent=31 // pred_check_branch
          %989 = sbr.rel (%p987) target = $region44
        $region43: #{tpu_custom_call.1} parent=31 // pred_region
          %v990 = vld [vmem:[#allocation2] sm:$0xff]
          %v991 = vld [vmem:[#allocation2 + $0x8] sm:$0xff]
          %v992 = vld [vmem:[#allocation2 + $0x10] sm:$0xff]
          %v993 = vld [vmem:[#allocation2 + $0x18] sm:$0xff]
          %v994 = vld [vmem:[#allocation2 + $0x20] sm:$0xff]
          %v995 = vld [vmem:[#allocation2 + $0x28] sm:$0xff]
          %v996 = vld [vmem:[#allocation2 + $0x30] sm:$0xff]
          %v997 = vld [vmem:[#allocation2 + $0x38] sm:$0xff]
          %v998 = vld [vmem:[#allocation2 + $0x40] sm:$0xff]
          %v999 = vld [vmem:[#allocation2 + $0x48] sm:$0xff]
          %v1000 = vld [vmem:[#allocation2 + $0x50] sm:$0xff]
          %v1001 = vld [vmem:[#allocation2 + $0x58] sm:$0xff]
          %v1002 = vld [vmem:[#allocation2 + $0x60] sm:$0xff]
          %v1003 = vld [vmem:[#allocation2 + $0x68] sm:$0xff]
          %v1004 = vld [vmem:[#allocation2 + $0x70] sm:$0xff]
          %v1005 = vld [vmem:[#allocation2 + $0x78] sm:$0xff]
          %v1006 = vld [vmem:[#allocation2 + $0x80] sm:$0xff]
          %v1007 = vld [vmem:[#allocation2 + $0x88] sm:$0xff]
          %v1008 = vld [vmem:[#allocation2 + $0x90] sm:$0xff]
          %v1009 = vld [vmem:[#allocation2 + $0x98] sm:$0xff]
          %v1010 = vld [vmem:[#allocation2 + $0xa0] sm:$0xff]
          %v1011 = vld [vmem:[#allocation2 + $0xa8] sm:$0xff]
          %v1012 = vld [vmem:[#allocation2 + $0xb0] sm:$0xff]
          %v1013 = vld [vmem:[#allocation2 + $0xb8] sm:$0xff]
          %v1014 = vld [vmem:[#allocation2 + $0xc0] sm:$0xff]
          %v1015 = vld [vmem:[#allocation2 + $0xc8] sm:$0xff]
          %v1016 = vld [vmem:[#allocation2 + $0xd0] sm:$0xff]
          %v1017 = vld [vmem:[#allocation2 + $0xd8] sm:$0xff]
          %v1018 = vld [vmem:[#allocation2 + $0xe0] sm:$0xff]
          %v1019 = vld [vmem:[#allocation2 + $0xe8] sm:$0xff]
          %v1020 = vld [vmem:[#allocation2 + $0xf0] sm:$0xff]
          %v1021 = vld [vmem:[#allocation2 + $0xf8] sm:$0xff]
          %v1022 = vld [vmem:[%s2] sm:$0xff]
          %v1023 = vld [vmem:[%s2 + $0x8] sm:$0xff]
          %v1024 = vld [vmem:[%s2 + $0x10] sm:$0xff]
          %v1025 = vld [vmem:[%s2 + $0x18] sm:$0xff]
          %v1026 = vld [vmem:[%s2 + $0x20] sm:$0xff]
          %v1027 = vld [vmem:[%s2 + $0x28] sm:$0xff]
          %v1028 = vld [vmem:[%s2 + $0x30] sm:$0xff]
          %v1029 = vld [vmem:[%s2 + $0x38] sm:$0xff]
          %v1031 = vsel %vm954, %v990, 0
          %v1034 = vsel %vm954, %v991, 0
          %v1037 = vsel %vm954, %v992, 0
          %v1040 = vsel %vm954, %v993, 0
          %v1043 = vsel %vm954, %v994, 0
          %v1046 = vsel %vm954, %v995, 0
          %v1049 = vsel %vm954, %v996, 0
          %v1052 = vsel %vm954, %v997, 0
          %v1055 = vsel %vm954, %v998, 0
          %v1058 = vsel %vm954, %v999, 0
          %v1061 = vsel %vm954, %v1000, 0
          %v1064 = vsel %vm954, %v1001, 0
          %v1067 = vsel %vm954, %v1002, 0
          %v1070 = vsel %vm954, %v1003, 0
          %v1073 = vsel %vm954, %v1004, 0
          %v1076 = vsel %vm954, %v1005, 0
          %v1079 = vsel %vm954, %v1006, 0
          %v1082 = vsel %vm954, %v1007, 0
          %v1085 = vsel %vm954, %v1008, 0
          %v1088 = vsel %vm954, %v1009, 0
          %v1091 = vsel %vm954, %v1010, 0
          %v1094 = vsel %vm954, %v1011, 0
          %v1097 = vsel %vm954, %v1012, 0
          %v1100 = vsel %vm954, %v1013, 0
          %v1103 = vsel %vm954, %v1014, 0
          %v1106 = vsel %vm954, %v1015, 0
          %v1109 = vsel %vm954, %v1016, 0
          %v1112 = vsel %vm954, %v1017, 0
          %v1115 = vsel %vm954, %v1018, 0
          %v1118 = vsel %vm954, %v1019, 0
          %v1121 = vsel %vm954, %v1020, 0
          %v1124 = vsel %vm954, %v1021, 0
          %1126 = vmatprep.subr.mxu0 0.0
          %1127 = vmatpush1.msra.mxu0 %v1022
          %1128 = vmatprep.subr.mxu0 0.0
          %1129 = vmatpush1.msra.mxu0 %v1023
          %1130 = vmatprep.subr.mxu0 0.0
          %1131 = vmatpush1.msra.mxu0 %v1024
          %1132 = vmatprep.subr.mxu0 0.0
          %1133 = vmatpush1.msra.mxu0 %v1025
          %1134 = vmatprep.subr.mxu0 0.0
          %1135 = vmatpush1.msra.mxu0 %v1026
          %1136 = vmatprep.subr.mxu0 0.0
          %1137 = vmatpush1.msra.mxu0 %v1027
          %1138 = vmatprep.subr.mxu0 0.0
          %1139 = vmatpush1.msra.mxu0 %v1028
          %1140 = vmatprep.subr.mxu0 0.0
          %1141 = vmatpush1.msra.mxu0 %v1029
          %1142 = vmatprep.subr.mxu0 0.0
          %1143 = vmatpush1.msra.mxu0 0.0
          %1144 = vmatprep.subr.mxu0 0.0
          %1145 = vmatpush1.msra.mxu0 0.0
          %1146 = vmatprep.subr.mxu0 0.0
          %1147 = vmatpush1.msra.mxu0 0.0
          %1148 = vmatprep.subr.mxu0 0.0
          %1149 = vmatpush1.msra.mxu0 0.0
          %1150 = vmatprep.subr.mxu0 0.0
          %1151 = vmatpush1.msra.mxu0 0.0
          %1152 = vmatprep.subr.mxu0 0.0
          %1153 = vmatpush1.msra.mxu0 0.0
          %1154 = vmatprep.subr.mxu0 0.0
          %1155 = vmatpush1.msra.mxu0 0.0
          %1156 = vmatprep.subr.mxu0 0.0
          %1157 = vmatpush1.msra.mxu0 0.0
          %1158 = vmatprep.subr.mxu0 0.0
          %1159 = vmatpush1.msra.mxu0 0.0
          %1160 = vmatprep.subr.mxu0 0.0
          %1161 = vmatpush1.msra.mxu0 0.0
          %1162 = vmatprep.subr.mxu0 0.0
          %1163 = vmatpush1.msra.mxu0 0.0
          %1164 = vmatprep.subr.mxu0 0.0
          %1165 = vmatpush1.msra.mxu0 0.0
          %1166 = vmatprep.subr.mxu0 0.0
          %1167 = vmatpush1.msra.mxu0 0.0
          %1168 = vmatprep.subr.mxu0 0.0
          %1169 = vmatpush1.msra.mxu0 0.0
          %1170 = vmatprep.subr.mxu0 0.0
          %1171 = vmatpush1.msra.mxu0 0.0
          %1172 = vmatprep.subr.mxu0 0.0
          %1173 = vmatpush1.msra.mxu0 0.0
          %1174 = vmatprep.subr.mxu0 0.0
          %1175 = vmatpush1.msra.mxu0 0.0
          %1176 = vmatprep.subr.mxu0 0.0
          %1177 = vmatpush1.msra.mxu0 0.0
          %1178 = vmatprep.subr.mxu0 0.0
          %1179 = vmatpush1.msra.mxu0 0.0
          %1180 = vmatprep.subr.mxu0 0.0
          %1181 = vmatpush1.msra.mxu0 0.0
          %1182 = vmatprep.subr.mxu0 0.0
          %1183 = vmatpush1.msra.mxu0 0.0
          %1184 = vmatprep.subr.mxu0 0.0
          %1185 = vmatpush1.msra.mxu0 0.0
          %1186 = vmatprep.subr.mxu0 0.0
          %1187 = vmatpush1.msra.mxu0 0.0
          %1188 = vmatprep.subr.mxu0 0.0
          %1189 = vmatpush1.msra.mxu0 0.0
          %1190 = vmatprep.mubr.f32.mxu0 0.0
          %1191 = vmatmul.mubr.f32.gmra.mrb[0].mxu0 %v1031
          %v1192 = vpop.f32.mrb[0].mxu0
          %v1193 = vadd.f32 0.0, %v1192
          %v1194 = vpop.f32.mrb[0].mxu0
          %1195 = vmatprep.mubr.f32.mxu0 0.0
          %1196 = vmatmul.mubr.f32.gmra.mrb[0].mxu0 %v1034
          %v1197 = vpop.f32.mrb[0].mxu0
          %v1198 = vadd.f32 0.0, %v1197
          %v1199 = vpop.f32.mrb[0].mxu0
          %1200 = vmatprep.mubr.f32.mxu0 0.0
          %1201 = vmatmul.mubr.f32.gmra.mrb[0].mxu0 %v1037
          %v1202 = vpop.f32.mrb[0].mxu0
          %v1203 = vadd.f32 0.0, %v1202
          %v1204 = vpop.f32.mrb[0].mxu0
          %1205 = vmatprep.mubr.f32.mxu0 0.0
          %1206 = vmatmul.mubr.f32.gmra.mrb[0].mxu0 %v1040
          %v1207 = vpop.f32.mrb[0].mxu0
          %v1208 = vadd.f32 0.0, %v1207
          %v1209 = vpop.f32.mrb[0].mxu0
          %1210 = vmatprep.mubr.f32.mxu0 0.0
          %1211 = vmatmul.mubr.f32.gmra.mrb[0].mxu0 %v1043
          %v1212 = vpop.f32.mrb[0].mxu0
          %v1213 = vadd.f32 0.0, %v1212
          %v1214 = vpop.f32.mrb[0].mxu0
          %1215 = vmatprep.mubr.f32.mxu0 0.0
          %1216 = vmatmul.mubr.f32.gmra.mrb[0].mxu0 %v1046
          %v1217 = vpop.f32.mrb[0].mxu0
          %v1218 = vadd.f32 0.0, %v1217
          %v1219 = vpop.f32.mrb[0].mxu0
          %1220 = vmatprep.mubr.f32.mxu0 0.0
          %1221 = vmatmul.mubr.f32.gmra.mrb[0].mxu0 %v1049
          %v1222 = vpop.f32.mrb[0].mxu0
          %v1223 = vadd.f32 0.0, %v1222
          %v1224 = vpop.f32.mrb[0].mxu0
          %1225 = vmatprep.mubr.f32.mxu0 0.0
          %1226 = vmatmul.mubr.f32.gmra.mrb[0].mxu0 %v1052
          %v1227 = vpop.f32.mrb[0].mxu0
          %v1228 = vadd.f32 0.0, %v1227
          %v1229 = vpop.f32.mrb[0].mxu0
          %1230 = vmatprep.mubr.f32.mxu0 0.0
          %1231 = vmatmul.mubr.f32.gmra.mrb[0].mxu0 %v1055
          %v1232 = vpop.f32.mrb[0].mxu0
          %v1233 = vadd.f32 0.0, %v1232
          %v1234 = vpop.f32.mrb[0].mxu0
          %1235 = vmatprep.mubr.f32.mxu0 0.0
          %1236 = vmatmul.mubr.f32.gmra.mrb[0].mxu0 %v1058
          %v1237 = vpop.f32.mrb[0].mxu0
          %v1238 = vadd.f32 0.0, %v1237
          %v1239 = vpop.f32.mrb[0].mxu0
          %1240 = vmatprep.mubr.f32.mxu0 0.0
          %1241 = vmatmul.mubr.f32.gmra.mrb[0].mxu0 %v1061
          %v1242 = vpop.f32.mrb[0].mxu0
          %v1243 = vadd.f32 0.0, %v1242
          %v1244 = vpop.f32.mrb[0].mxu0
          %1245 = vmatprep.mubr.f32.mxu0 0.0
          %1246 = vmatmul.mubr.f32.gmra.mrb[0].mxu0 %v1064
          %v1247 = vpop.f32.mrb[0].mxu0
          %v1248 = vadd.f32 0.0, %v1247
          %v1249 = vpop.f32.mrb[0].mxu0
          %1250 = vmatprep.mubr.f32.mxu0 0.0
          %1251 = vmatmul.mubr.f32.gmra.mrb[0].mxu0 %v1067
          %v1252 = vpop.f32.mrb[0].mxu0
          %v1253 = vadd.f32 0.0, %v1252
          %v1254 = vpop.f32.mrb[0].mxu0
          %1255 = vmatprep.mubr.f32.mxu0 0.0
          %1256 = vmatmul.mubr.f32.gmra.mrb[0].mxu0 %v1070
          %v1257 = vpop.f32.mrb[0].mxu0
          %v1258 = vadd.f32 0.0, %v1257
          %v1259 = vpop.f32.mrb[0].mxu0
          %1260 = vmatprep.mubr.f32.mxu0 0.0
          %1261 = vmatmul.mubr.f32.gmra.mrb[0].mxu0 %v1073
          %v1262 = vpop.f32.mrb[0].mxu0
          %v1263 = vadd.f32 0.0, %v1262
          %v1264 = vpop.f32.mrb[0].mxu0
          %1265 = vmatprep.mubr.f32.mxu0 0.0
          %1266 = vmatmul.mubr.f32.gmra.mrb[0].mxu0 %v1076
          %v1267 = vpop.f32.mrb[0].mxu0
          %v1268 = vadd.f32 0.0, %v1267
          %v1269 = vpop.f32.mrb[0].mxu0
          %1270 = vmatprep.mubr.f32.mxu0 0.0
          %1271 = vmatmul.mubr.f32.gmra.mrb[0].mxu0 %v1079
          %v1272 = vpop.f32.mrb[0].mxu0
          %v1273 = vadd.f32 0.0, %v1272
          %v1274 = vpop.f32.mrb[0].mxu0
          %1275 = vmatprep.mubr.f32.mxu0 0.0
          %1276 = vmatmul.mubr.f32.gmra.mrb[0].mxu0 %v1082
          %v1277 = vpop.f32.mrb[0].mxu0
          %v1278 = vadd.f32 0.0, %v1277
          %v1279 = vpop.f32.mrb[0].mxu0
          %1280 = vmatprep.mubr.f32.mxu0 0.0
          %1281 = vmatmul.mubr.f32.gmra.mrb[0].mxu0 %v1085
          %v1282 = vpop.f32.mrb[0].mxu0
          %v1283 = vadd.f32 0.0, %v1282
          %v1284 = vpop.f32.mrb[0].mxu0
          %1285 = vmatprep.mubr.f32.mxu0 0.0
          %1286 = vmatmul.mubr.f32.gmra.mrb[0].mxu0 %v1088
          %v1287 = vpop.f32.mrb[0].mxu0
          %v1288 = vadd.f32 0.0, %v1287
          %v1289 = vpop.f32.mrb[0].mxu0
          %1290 = vmatprep.mubr.f32.mxu0 0.0
          %1291 = vmatmul.mubr.f32.gmra.mrb[0].mxu0 %v1091
          %v1292 = vpop.f32.mrb[0].mxu0
          %v1293 = vadd.f32 0.0, %v1292
          %v1294 = vpop.f32.mrb[0].mxu0
          %1295 = vmatprep.mubr.f32.mxu0 0.0
          %1296 = vmatmul.mubr.f32.gmra.mrb[0].mxu0 %v1094
          %v1297 = vpop.f32.mrb[0].mxu0
          %v1298 = vadd.f32 0.0, %v1297
          %v1299 = vpop.f32.mrb[0].mxu0
          %1300 = vmatprep.mubr.f32.mxu0 0.0
          %1301 = vmatmul.mubr.f32.gmra.mrb[0].mxu0 %v1097
          %v1302 = vpop.f32.mrb[0].mxu0
          %v1303 = vadd.f32 0.0, %v1302
          %v1304 = vpop.f32.mrb[0].mxu0
          %1305 = vmatprep.mubr.f32.mxu0 0.0
          %1306 = vmatmul.mubr.f32.gmra.mrb[0].mxu0 %v1100
          %v1307 = vpop.f32.mrb[0].mxu0
          %v1308 = vadd.f32 0.0, %v1307
          %v1309 = vpop.f32.mrb[0].mxu0
          %1310 = vmatprep.mubr.f32.mxu0 0.0
          %1311 = vmatmul.mubr.f32.gmra.mrb[0].mxu0 %v1103
          %v1312 = vpop.f32.mrb[0].mxu0
          %v1313 = vadd.f32 0.0, %v1312
          %v1314 = vpop.f32.mrb[0].mxu0
          %1315 = vmatprep.mubr.f32.mxu0 0.0
          %1316 = vmatmul.mubr.f32.gmra.mrb[0].mxu0 %v1106
          %v1317 = vpop.f32.mrb[0].mxu0
          %v1318 = vadd.f32 0.0, %v1317
          %v1319 = vpop.f32.mrb[0].mxu0
          %1320 = vmatprep.mubr.f32.mxu0 0.0
          %1321 = vmatmul.mubr.f32.gmra.mrb[0].mxu0 %v1109
          %v1322 = vpop.f32.mrb[0].mxu0
          %v1323 = vadd.f32 0.0, %v1322
          %v1324 = vpop.f32.mrb[0].mxu0
          %1325 = vmatprep.mubr.f32.mxu0 0.0
          %1326 = vmatmul.mubr.f32.gmra.mrb[0].mxu0 %v1112
          %v1327 = vpop.f32.mrb[0].mxu0
          %v1328 = vadd.f32 0.0, %v1327
          %v1329 = vpop.f32.mrb[0].mxu0
          %1330 = vmatprep.mubr.f32.mxu0 0.0
          %1331 = vmatmul.mubr.f32.gmra.mrb[0].mxu0 %v1115
          %v1332 = vpop.f32.mrb[0].mxu0
          %v1333 = vadd.f32 0.0, %v1332
          %v1334 = vpop.f32.mrb[0].mxu0
          %1335 = vmatprep.mubr.f32.mxu0 0.0
          %1336 = vmatmul.mubr.f32.gmra.mrb[0].mxu0 %v1118
          %v1337 = vpop.f32.mrb[0].mxu0
          %v1338 = vadd.f32 0.0, %v1337
          %v1339 = vpop.f32.mrb[0].mxu0
          %1340 = vmatprep.mubr.f32.mxu0 0.0
          %1341 = vmatmul.mubr.f32.gmra.mrb[0].mxu0 %v1121
          %v1342 = vpop.f32.mrb[0].mxu0
          %v1343 = vadd.f32 0.0, %v1342
          %v1344 = vpop.f32.mrb[0].mxu0
          %1345 = vmatprep.mubr.f32.mxu0 0.0
          %1346 = vmatmul.mubr.f32.gmra.mrb[0].mxu0 %v1124
          %v1347 = vpop.f32.mrb[0].mxu0
          %v1348 = vadd.f32 0.0, %v1347
          %v1349 = vpop.f32.mrb[0].mxu0
          %1350 = vdwg.mxu0
          %v1351 = vmax.f32 %v1193, 0.0
          %v1352 = vmax.f32 %v1198, 0.0
          %v1353 = vmax.f32 %v1203, 0.0
          %v1354 = vmax.f32 %v1208, 0.0
          %v1355 = vmax.f32 %v1213, 0.0
          %v1356 = vmax.f32 %v1218, 0.0
          %v1357 = vmax.f32 %v1223, 0.0
          %v1358 = vmax.f32 %v1228, 0.0
          %v1359 = vmax.f32 %v1233, 0.0
          %v1360 = vmax.f32 %v1238, 0.0
          %v1361 = vmax.f32 %v1243, 0.0
          %v1362 = vmax.f32 %v1248, 0.0
          %v1363 = vmax.f32 %v1253, 0.0
          %v1364 = vmax.f32 %v1258, 0.0
          %v1365 = vmax.f32 %v1263, 0.0
          %v1366 = vmax.f32 %v1268, 0.0
          %v1367 = vmax.f32 %v1273, 0.0
          %v1368 = vmax.f32 %v1278, 0.0
          %v1369 = vmax.f32 %v1283, 0.0
          %v1370 = vmax.f32 %v1288, 0.0
          %v1371 = vmax.f32 %v1293, 0.0
          %v1372 = vmax.f32 %v1298, 0.0
          %v1373 = vmax.f32 %v1303, 0.0
          %v1374 = vmax.f32 %v1308, 0.0
          %v1375 = vmax.f32 %v1313, 0.0
          %v1376 = vmax.f32 %v1318, 0.0
          %v1377 = vmax.f32 %v1323, 0.0
          %v1378 = vmax.f32 %v1328, 0.0
          %v1379 = vmax.f32 %v1333, 0.0
          %v1380 = vmax.f32 %v1338, 0.0
          %v1381 = vmax.f32 %v1343, 0.0
          %v1382 = vmax.f32 %v1348, 0.0
          %1383 = vst [vmem:[%s205] sm:$0xff] %v1351
          %1384 = vst [vmem:[%s205 + $0x8] sm:$0xff] %v1352
          %1385 = vst [vmem:[%s205 + $0x10] sm:$0xff] %v1353
          %1386 = vst [vmem:[%s205 + $0x18] sm:$0xff] %v1354
          %1387 = vst [vmem:[%s205 + $0x20] sm:$0xff] %v1355
          %1388 = vst [vmem:[%s205 + $0x28] sm:$0xff] %v1356
          %1389 = vst [vmem:[%s205 + $0x30] sm:$0xff] %v1357
          %1390 = vst [vmem:[%s205 + $0x38] sm:$0xff] %v1358
          %1391 = vst [vmem:[%s205 + $0x40] sm:$0xff] %v1359
          %1392 = vst [vmem:[%s205 + $0x48] sm:$0xff] %v1360
          %1393 = vst [vmem:[%s205 + $0x50] sm:$0xff] %v1361
          %1394 = vst [vmem:[%s205 + $0x58] sm:$0xff] %v1362
          %1395 = vst [vmem:[%s205 + $0x60] sm:$0xff] %v1363
          %1396 = vst [vmem:[%s205 + $0x68] sm:$0xff] %v1364
          %1397 = vst [vmem:[%s205 + $0x70] sm:$0xff] %v1365
          %1398 = vst [vmem:[%s205 + $0x78] sm:$0xff] %v1366
          %1399 = vst [vmem:[%s205 + $0x80] sm:$0xff] %v1367
          %1400 = vst [vmem:[%s205 + $0x88] sm:$0xff] %v1368
          %1401 = vst [vmem:[%s205 + $0x90] sm:$0xff] %v1369
          %1402 = vst [vmem:[%s205 + $0x98] sm:$0xff] %v1370
          %1403 = vst [vmem:[%s205 + $0xa0] sm:$0xff] %v1371
          %1404 = vst [vmem:[%s205 + $0xa8] sm:$0xff] %v1372
          %1405 = vst [vmem:[%s205 + $0xb0] sm:$0xff] %v1373
          %1406 = vst [vmem:[%s205 + $0xb8] sm:$0xff] %v1374
          %1407 = vst [vmem:[%s205 + $0xc0] sm:$0xff] %v1375
          %1408 = vst [vmem:[%s205 + $0xc8] sm:$0xff] %v1376
          %1409 = vst [vmem:[%s205 + $0xd0] sm:$0xff] %v1377
          %1410 = vst [vmem:[%s205 + $0xd8] sm:$0xff] %v1378
          %1411 = vst [vmem:[%s205 + $0xe0] sm:$0xff] %v1379
          %1412 = vst [vmem:[%s205 + $0xe8] sm:$0xff] %v1380
          %1413 = vst [vmem:[%s205 + $0xf0] sm:$0xff] %v1381
          %1414 = vst [vmem:[%s205 + $0xf8] sm:$0xff] %v1382
        $region44: #{tpu_custom_call.1} parent=31 // pred_fallthru
          _
        %s1415 = sand.u32 %s110, 1
        %s1416 = scalar_lea.sflag [#allocation5], %s1415
        %s1417 = sand.u32 %s110, 1
        %s1418 = smul.addr %s1417, 256
        %s1419 = scalar_lea.vmem [#allocation6], %s1418
        // Predicated region
        $region45: #{tpu_custom_call.1} parent=31 // pred_check
          %p1420 = pneg %p120
        $region46: #{tpu_custom_call.1} parent=31 // pred_check_branch
          %1422 = sbr.rel (%p1420) target = $region48
        $region47: #{tpu_custom_call.1} parent=31 // pred_region
          %s1423 = smul.u32 32, %s24
          %s1425 = ssub.s32 4096, 4096
          %1426 = vsyncadd %s1416, %s1425
          %s1427 = smul.addr %s1423, 128
          %s1428 = scalar_lea.hbm %s3, %s1427
          %s1429 = sshll.u32 %s1419, 4
          %s1430 = int_to_ptr.vmem [resolvable:$true] %s1429
          %1435 = dma.vmem_to_hbm [thread:$0]  %s1430, 4096, %s1428, %s1416, 128, 128, 8
        $region48: #{tpu_custom_call.1} parent=31 // pred_fallthru
          _
      $region32: #{tpu_custom_call.1} parent=5 // pred_fallthru
        _
      %p1436 = scmp.le.s32.totalorder 2, %s15
      // Predicated region
      $region49: #{tpu_custom_call.1} parent=5 // pred_check
        %p1437 = pneg %p1436
      $region50: #{tpu_custom_call.1} parent=5 // pred_check_branch
        %1439 = sbr.rel (%p1437) target = $region52
      $region51: #{tpu_custom_call.1} parent=5 // pred_region
        %s1440 = ssub.s32 %s15, 2
        // Predicated region
        $region53: #{tpu_custom_call.1} parent=51 // pred_check
          %p1441 = pneg %p126
        $region54: #{tpu_custom_call.1} parent=51 // pred_check_branch
          %1443 = sbr.rel (%p1441) target = $region56
        $region55: #{tpu_custom_call.1} parent=51 // pred_region
          %s1444 = sand.u32 %s111, 1
          %s1445 = scalar_lea.sflag [#allocation5], %s1444
          %s1446 = sand.u32 %s111, 1
          %s1447 = smul.addr %s1446, 256
          %s1448 = scalar_lea.vmem [#allocation6], %s1447
          %1449 = dma.done %s1445, 4096
        $region56: #{tpu_custom_call.1} parent=51 // pred_fallthru
          _
      $region52: #{tpu_custom_call.1} parent=5 // pred_fallthru
        _
    $region6: #{tpu_custom_call.1} parent=1 // loop_footer
      %s19 = sadd.s32 1, %s15
    $region7: #{tpu_custom_call.1} parent=1 // loop_footer_branch
      %14 = sbr.rel target = $region3
    $region8: #{tpu_custom_call.1} parent=1 // loop_exit
      _
    %1450 = vsyncpa [#allocation4], 1
    %s1451 = scalar_lea.sflag [#allocation4], 1
    %1452 = vsyncpa %s1451, 1
    %1453 = vsyncpa [#allocation5], 1
    %s1454 = scalar_lea.sflag [#allocation5], 1
    %1455 = vsyncpa %s1454, 1

</llo_original>
